<compile_context>
chip_gen: v5e
topology: v5e:2x2
jax: 0.10.0
libtpu: 0.0.40
codegen_flags: <defaults>
</compile_context>

<pallas_src>
import jax
import jax.numpy as jnp
from jax.experimental import pallas as pl
from jax.experimental.pallas import tpu as pltpu

BN_EPS = 1e-5


def _pick_tile(total, max_tile, mult=1):
    """Largest divisor of `total` that is <= max_tile and a multiple of `mult`.
    Falls back to `total` (a full-extent block is always a legal BlockSpec)."""
    best = None
    for t in range(1, min(total, max_tile) + 1):
        if total % t == 0 and t % mult == 0:
            best = t
    return best if best is not None else total


# ---------------------------------------------------------------------------
# Pass 1: strided conv (9 tap matmuls, bf16 MXU, f32 acc) + partial BN stats
# ---------------------------------------------------------------------------
def conv_stats_kernel(p00b_ref, p00e_ref, p01b_ref, p01e_ref, p10_ref, p11_ref,
                      w_ref, y_ref, stats_ref):
    tho = p10_ref.shape[1]          # output-row tile
    wo = p10_ref.shape[2] - 1       # output width
    c = p10_ref.shape[3]            # channels

    # Even-row planes get one extra "edge" row so the kh=2 taps (+1 row shift)
    # stay inside the tile; odd-row planes need exactly tho rows.
    x00 = jnp.concatenate([p00b_ref[0], p00e_ref[0]], axis=0)   # (tho+1, wo+1, c)
    x01 = jnp.concatenate([p01b_ref[0], p01e_ref[0]], axis=0)   # (tho+1, wo+1, c)
    x10 = p10_ref[0]                                            # (tho,   wo+1, c)
    x11 = p11_ref[0]

    # tap k = kh*3 + kw  ->  (plane, row shift dh, col shift dw)
    taps = (
        (x00, 0, 0), (x01, 0, 0), (x00, 0, 1),    # kh = 0
        (x10, 0, 0), (x11, 0, 0), (x10, 0, 1),    # kh = 1
        (x00, 1, 0), (x01, 1, 0), (x00, 1, 1),    # kh = 2
    )

    acc = None
    for k, (xpl, dh, dw) in enumerate(taps):
        lhs = xpl[dh:dh + tho, dw:dw + wo, :].reshape(tho * wo, c)   # bf16
        part = jnp.dot(lhs, w_ref[k], preferred_element_type=jnp.float32)
        acc = part if acc is None else acc + part                    # (tho*wo, c) f32

    # Per-tile partial statistics (one-pass sum / sum-of-squares) for the
    # global BatchNorm batch statistics.
    s1 = jnp.sum(acc, axis=0, keepdims=True)                         # (1, c)
    s2 = jnp.sum(acc * acc, axis=0, keepdims=True)                   # (1, c)
    stats_ref[0, 0] = jnp.concatenate([s1, s2], axis=0)              # (2, c)

    y_ref[0] = acc.reshape(tho, wo, c)                               # f32 conv out


# ---------------------------------------------------------------------------
# Pass 2: fused BatchNorm scale/shift + ReLU on a lane-dense layout
# ---------------------------------------------------------------------------
def bn_relu_kernel(y_ref, scale_ref, shift_ref, o_ref):
    o_ref[...] = jnp.maximum(y_ref[...] * scale_ref[...] + shift_ref[...], 0.0)


def downsampling_forward(x_nchw, w_oihw, bias, gamma, beta):
    """x_nchw: (N, C, H, W) float32.  Returns (N, C, Ho, Wo) float32."""
    del bias  # a per-channel conv bias is cancelled exactly by batch-stats BN
    N, C, H, W = x_nchw.shape
    Ho = (H - 1) // 2 + 1
    Wo = (W - 1) // 2 + 1

    # ---- glue (single pass over the activation, no 9x im2col blow-up) ------
    # NCHW -> NHWC, bf16 for the MXU/DMA, pad so every 3x3/stride-2 tap is
    # in-bounds, then split into the four stride-2 polyphase planes.
    x = jnp.transpose(x_nchw.astype(jnp.bfloat16), (0, 2, 3, 1))
    hp, wp = 2 * Ho + 2, 2 * Wo + 2
    xp = jnp.pad(x, ((0, 0), (1, hp - H - 1), (1, wp - W - 1), (0, 0)))
    p00 = xp[:, 0::2, 0::2, :]          # (N, Ho+1, Wo+1, C) each
    p01 = xp[:, 0::2, 1::2, :]
    p10 = xp[:, 1::2, 0::2, :]
    p11 = xp[:, 1::2, 1::2, :]

    # (Cout, Cin, kh, kw) -> (kh*3+kw, Cin, Cout), bf16 for the MXU.
    w9 = jnp.transpose(w_oihw, (2, 3, 1, 0)).reshape(9, C, C).astype(jnp.bfloat16)

    # ---- pass 1: conv + partial BN stats, tiled over (batch, row blocks) ---
    # Tile sized for ~2 MiB of live block data -> plenty of headroom for the
    # double-buffered pipeline even under v7x's smaller VMEM.
    row_bytes = 4 * (Wo + 1) * C * 2 + Wo * C * 4      # bf16 plane rows + f32 out row
    tho = _pick_tile(Ho, max(1, (2 * 1024 * 1024) // row_bytes))
    R = Ho // tho

    body_spec = pl.BlockSpec((1, tho, Wo + 1, C), lambda n, r: (n, r, 0, 0))
    edge_spec = pl.BlockSpec((1, 1, Wo + 1, C),
                             lambda n, r: (n, (r + 1) * tho, 0, 0))
    w_spec = pl.BlockSpec((9, C, C), lambda n, r: (0, 0, 0))

    flops = 2 * N * Ho * Wo * 9 * C * C
    bytes_accessed = (4 * N * (Ho + 1) * (Wo + 1) * C * 2   # polyphase planes (bf16)
                      + 9 * C * C * 2                        # weights (bf16)
                      + N * Ho * Wo * C * 4                  # conv output (f32)
                      + N * R * 2 * C * 4)                   # partial stats (f32)

    y_conv, stats = pl.pallas_call(
        conv_stats_kernel,
        grid=(N, R),
        in_specs=[body_spec, edge_spec,        # p00 body + edge row
                  body_spec, edge_spec,        # p01 body + edge row
                  body_spec, body_spec,        # p10, p11
                  w_spec],
        out_specs=(pl.BlockSpec((1, tho, Wo, C), lambda n, r: (n, r, 0, 0)),
                   pl.BlockSpec((1, 1, 2, C), lambda n, r: (n, r, 0, 0))),
        out_shape=(jax.ShapeDtypeStruct((N, Ho, Wo, C), jnp.float32),
                   jax.ShapeDtypeStruct((N, R, 2, C), jnp.float32)),
        compiler_params=pltpu.CompilerParams(
            dimension_semantics=("parallel", "parallel")),
        cost_estimate=pl.CostEstimate(flops=flops, transcendentals=0,
                                      bytes_accessed=bytes_accessed),
    )(p00, p00, p01, p01, p10, p11, w9)

    # ---- global BatchNorm batch stats + folded scale/shift (tiny, in XLA) --
    count = N * Ho * Wo
    sums = jnp.sum(stats, axis=(0, 1))                      # (2, C)
    mean = sums[0] / count
    var = jnp.maximum(sums[1] / count - mean * mean, 0.0)   # one-pass variance
    scale = gamma * jax.lax.rsqrt(var + BN_EPS)             # (C,)
    shift = beta - mean * scale                             # (C,)

    # ---- pass 2: normalize + ReLU on a lane-dense (rows, Wo*C) layout ------
    M2, L = N * Ho, Wo * C
    y2 = y_conv.reshape(M2, L)                              # contiguous -> free
    scale_row = jnp.tile(scale, Wo).reshape(1, L).astype(jnp.float32)
    shift_row = jnp.tile(shift, Wo).reshape(1, L).astype(jnp.float32)

    tm = _pick_tile(M2, max(8, (4 * 1024 * 1024) // (8 * L)), mult=8)
    out2 = pl.pallas_call(
        bn_relu_kernel,
        grid=(M2 // tm,),
        in_specs=[pl.BlockSpec((tm, L), lambda i: (i, 0)),
                  pl.BlockSpec((1, L), lambda i: (0, 0)),
                  pl.BlockSpec((1, L), lambda i: (0, 0))],
        out_specs=pl.BlockSpec((tm, L), lambda i: (i, 0)),
        out_shape=jax.ShapeDtypeStruct((M2, L), jnp.float32),
        compiler_params=pltpu.CompilerParams(dimension_semantics=("parallel",)),
    )(y2, scale_row, shift_row)

    # (N*Ho, Wo*C) -> (N, Ho, Wo, C) -> NCHW to match the PyTorch module.
    # TODO(synk): keep NHWC end-to-end if the surrounding model allows it, to
    # drop the two wrapper-side layout transposes.
    return jnp.transpose(out2.reshape(N, Ho, Wo, C), (0, 3, 1, 2))


def reference_forward(x_nchw, w_oihw, bias, gamma, beta):
    """Plain-JAX reference mirroring the PyTorch module (training-mode BN).
    Conv inputs are cast to bf16 to mirror the kernel's bf16 MXU path."""
    C = x_nchw.shape[1]
    y = jax.lax.conv_general_dilated(
        x_nchw.astype(jnp.bfloat16), w_oihw.astype(jnp.bfloat16),
        window_strides=(2, 2), padding=((1, 1), (1, 1)),
        dimension_numbers=("NCHW", "OIHW", "NCHW"),
        preferred_element_type=jnp.float32)
    y = y + bias.reshape(1, C, 1, 1)   # kernel folds this out (BN cancels it)
    mean = jnp.mean(y, axis=(0, 2, 3), keepdims=True)
    var = jnp.mean(jnp.square(y - mean), axis=(0, 2, 3), keepdims=True)
    y = (y - mean) * jax.lax.rsqrt(var + BN_EPS)
    y = y * gamma.reshape(1, C, 1, 1) + beta.reshape(1, C, 1, 1)
    return jnp.maximum(y, 0.0)


if __name__ == "__main__":
    N, C, H, W = 2, 4, 16, 16
    key = jax.random.PRNGKey(0)
    kx, kw, kb, kg, kbt = jax.random.split(key, 5)

    x = jax.random.normal(kx, (N, C, H, W), dtype=jnp.float32)
    # Shapes from nn.Conv2d(ch, ch, 3) / nn.BatchNorm2d(ch)
    w_conv = jax.random.normal(kw, (C, C, 3, 3), dtype=jnp.float32) * 0.1
    b_conv = jax.random.normal(kb, (C,), dtype=jnp.float32) * 0.1
    gamma = 1.0 + 0.1 * jax.random.normal(kg, (C,), dtype=jnp.float32)
    beta = 0.1 * jax.random.normal(kbt, (C,), dtype=jnp.float32)

    out = jax.jit(downsampling_forward)(x, w_conv, b_conv, gamma, beta)
    jax.block_until_ready(out)

    Ho = (H - 1) // 2 + 1
    Wo = (W - 1) // 2 + 1
    ref = reference_forward(x, w_conv, b_conv, gamma, beta)
    assert out.shape == (N, C, Ho, Wo), out.shape
    max_err = float(jnp.max(jnp.abs(out - ref)))
    assert jnp.allclose(out, ref, rtol=1e-3, atol=1e-3), max_err

    print("KERNEL_OK")
</pallas_src>

<mosaic_0001>
module attributes {stable_mosaic.version = 11 : i64} {
  func.func @conv_stats_kernel(%arg0: i32, %arg1: i32, %arg2: memref<1x8x9x4xbf16, #tpu.memory_space<vmem>>, %arg3: memref<1x1x9x4xbf16, #tpu.memory_space<vmem>>, %arg4: memref<1x8x9x4xbf16, #tpu.memory_space<vmem>>, %arg5: memref<1x1x9x4xbf16, #tpu.memory_space<vmem>>, %arg6: memref<1x8x9x4xbf16, #tpu.memory_space<vmem>>, %arg7: memref<1x8x9x4xbf16, #tpu.memory_space<vmem>>, %arg8: memref<9x4x4xbf16, #tpu.memory_space<vmem>>, %arg9: memref<1x8x8x4xf32, #tpu.memory_space<vmem>>, %arg10: memref<1x1x2x4xf32, #tpu.memory_space<vmem>>) attributes {dimension_semantics = [#tpu.dimension_semantics<parallel>, #tpu.dimension_semantics<parallel>], iteration_bounds = array<i64: 2, 1>, scalar_prefetch = 0 : i64, scratch_operands = 0 : i64, tpu.core_type = #tpu.core_type<tc>, window_params = [{transform_indices = @transform_0, window_bounds = array<i64: 1, 8, 9, 4>}, {transform_indices = @transform_1, window_bounds = array<i64: 1, 1, 9, 4>}, {transform_indices = @transform_2, window_bounds = array<i64: 1, 8, 9, 4>}, {transform_indices = @transform_3, window_bounds = array<i64: 1, 1, 9, 4>}, {transform_indices = @transform_4, window_bounds = array<i64: 1, 8, 9, 4>}, {transform_indices = @transform_5, window_bounds = array<i64: 1, 8, 9, 4>}, {pipeline_mode = #tpu.pipeline_mode<synchronous>, transform_indices = @transform_6, window_bounds = array<i64: 9, 4, 4>}, {transform_indices = @transform_7, window_bounds = array<i64: 1, 8, 8, 4>}, {transform_indices = @transform_8, window_bounds = array<i64: 1, 1, 2, 4>}]} {
    %c0 = arith.constant 0 : index
    %c0_0 = arith.constant 0 : index
    %c0_1 = arith.constant 0 : index
    %c0_2 = arith.constant 0 : index
    %0 = vector.load %arg2[%c0, %c0_0, %c0_1, %c0_2] : memref<1x8x9x4xbf16, #tpu.memory_space<vmem>>, vector<1x8x9x4xbf16>
    %1 = vector.shape_cast %0 : vector<1x8x9x4xbf16> to vector<8x9x4xbf16>
    %c0_3 = arith.constant 0 : index
    %c0_4 = arith.constant 0 : index
    %c0_5 = arith.constant 0 : index
    %c0_6 = arith.constant 0 : index
    %2 = vector.load %arg3[%c0_3, %c0_4, %c0_5, %c0_6] : memref<1x1x9x4xbf16, #tpu.memory_space<vmem>>, vector<1x1x9x4xbf16>
    %3 = vector.shape_cast %2 : vector<1x1x9x4xbf16> to vector<1x9x4xbf16>
    %4 = tpu.concatenate %1, %3 in 0 : vector<8x9x4xbf16>, vector<1x9x4xbf16> -> vector<9x9x4xbf16>
    %c0_7 = arith.constant 0 : index
    %c0_8 = arith.constant 0 : index
    %c0_9 = arith.constant 0 : index
    %c0_10 = arith.constant 0 : index
    %5 = vector.load %arg4[%c0_7, %c0_8, %c0_9, %c0_10] : memref<1x8x9x4xbf16, #tpu.memory_space<vmem>>, vector<1x8x9x4xbf16>
    %6 = vector.shape_cast %5 : vector<1x8x9x4xbf16> to vector<8x9x4xbf16>
    %c0_11 = arith.constant 0 : index
    %c0_12 = arith.constant 0 : index
    %c0_13 = arith.constant 0 : index
    %c0_14 = arith.constant 0 : index
    %7 = vector.load %arg5[%c0_11, %c0_12, %c0_13, %c0_14] : memref<1x1x9x4xbf16, #tpu.memory_space<vmem>>, vector<1x1x9x4xbf16>
    %8 = vector.shape_cast %7 : vector<1x1x9x4xbf16> to vector<1x9x4xbf16>
    %9 = tpu.concatenate %6, %8 in 0 : vector<8x9x4xbf16>, vector<1x9x4xbf16> -> vector<9x9x4xbf16>
    %c0_15 = arith.constant 0 : index
    %c0_16 = arith.constant 0 : index
    %c0_17 = arith.constant 0 : index
    %c0_18 = arith.constant 0 : index
    %10 = vector.load %arg6[%c0_15, %c0_16, %c0_17, %c0_18] : memref<1x8x9x4xbf16, #tpu.memory_space<vmem>>, vector<1x8x9x4xbf16>
    %11 = vector.shape_cast %10 : vector<1x8x9x4xbf16> to vector<8x9x4xbf16>
    %c0_19 = arith.constant 0 : index
    %c0_20 = arith.constant 0 : index
    %c0_21 = arith.constant 0 : index
    %c0_22 = arith.constant 0 : index
    %12 = vector.load %arg7[%c0_19, %c0_20, %c0_21, %c0_22] : memref<1x8x9x4xbf16, #tpu.memory_space<vmem>>, vector<1x8x9x4xbf16>
    %13 = vector.shape_cast %12 : vector<1x8x9x4xbf16> to vector<8x9x4xbf16>
    %14 = vector.extract_strided_slice %4 {offsets = [0, 0, 0], sizes = [8, 8, 4], strides = [1, 1, 1]} : vector<9x9x4xbf16> to vector<8x8x4xbf16>
    %15 = vector.shape_cast %14 : vector<8x8x4xbf16> to vector<64x4xbf16>
    %c0_23 = arith.constant 0 : index
    %c0_24 = arith.constant 0 : index
    %c0_25 = arith.constant 0 : index
    %16 = vector.load %arg8[%c0_23, %c0_24, %c0_25] : memref<9x4x4xbf16, #tpu.memory_space<vmem>>, vector<1x4x4xbf16>
    %17 = vector.shape_cast %16 : vector<1x4x4xbf16> to vector<4x4xbf16>
    %cst = arith.constant dense<0.000000e+00> : vector<64x4xf32>
    %18 = tpu.matmul %15, %17, %cst {dimension_numbers = #tpu.dot_dimension_numbers<[1], [0], [0], [1], [0, 0, 1, 1], [], []>} : vector<64x4xbf16>, vector<4x4xbf16>, vector<64x4xf32> -> vector<64x4xf32>
    %19 = vector.extract_strided_slice %9 {offsets = [0, 0, 0], sizes = [8, 8, 4], strides = [1, 1, 1]} : vector<9x9x4xbf16> to vector<8x8x4xbf16>
    %20 = vector.shape_cast %19 : vector<8x8x4xbf16> to vector<64x4xbf16>
    %c1 = arith.constant 1 : index
    %c0_26 = arith.constant 0 : index
    %c0_27 = arith.constant 0 : index
    %21 = vector.load %arg8[%c1, %c0_26, %c0_27] : memref<9x4x4xbf16, #tpu.memory_space<vmem>>, vector<1x4x4xbf16>
    %22 = vector.shape_cast %21 : vector<1x4x4xbf16> to vector<4x4xbf16>
    %cst_28 = arith.constant dense<0.000000e+00> : vector<64x4xf32>
    %23 = tpu.matmul %20, %22, %cst_28 {dimension_numbers = #tpu.dot_dimension_numbers<[1], [0], [0], [1], [0, 0, 1, 1], [], []>} : vector<64x4xbf16>, vector<4x4xbf16>, vector<64x4xf32> -> vector<64x4xf32>
    %24 = arith.addf %18, %23 : vector<64x4xf32>
    %25 = vector.extract_strided_slice %4 {offsets = [0, 1, 0], sizes = [8, 8, 4], strides = [1, 1, 1]} : vector<9x9x4xbf16> to vector<8x8x4xbf16>
    %26 = vector.shape_cast %25 : vector<8x8x4xbf16> to vector<64x4xbf16>
    %c2 = arith.constant 2 : index
    %c0_29 = arith.constant 0 : index
    %c0_30 = arith.constant 0 : index
    %27 = vector.load %arg8[%c2, %c0_29, %c0_30] : memref<9x4x4xbf16, #tpu.memory_space<vmem>>, vector<1x4x4xbf16>
    %28 = vector.shape_cast %27 : vector<1x4x4xbf16> to vector<4x4xbf16>
    %cst_31 = arith.constant dense<0.000000e+00> : vector<64x4xf32>
    %29 = tpu.matmul %26, %28, %cst_31 {dimension_numbers = #tpu.dot_dimension_numbers<[1], [0], [0], [1], [0, 0, 1, 1], [], []>} : vector<64x4xbf16>, vector<4x4xbf16>, vector<64x4xf32> -> vector<64x4xf32>
    %30 = arith.addf %24, %29 : vector<64x4xf32>
    %31 = vector.extract_strided_slice %11 {offsets = [0, 0, 0], sizes = [8, 8, 4], strides = [1, 1, 1]} : vector<8x9x4xbf16> to vector<8x8x4xbf16>
    %32 = vector.shape_cast %31 : vector<8x8x4xbf16> to vector<64x4xbf16>
    %c3 = arith.constant 3 : index
    %c0_32 = arith.constant 0 : index
    %c0_33 = arith.constant 0 : index
    %33 = vector.load %arg8[%c3, %c0_32, %c0_33] : memref<9x4x4xbf16, #tpu.memory_space<vmem>>, vector<1x4x4xbf16>
    %34 = vector.shape_cast %33 : vector<1x4x4xbf16> to vector<4x4xbf16>
    %cst_34 = arith.constant dense<0.000000e+00> : vector<64x4xf32>
    %35 = tpu.matmul %32, %34, %cst_34 {dimension_numbers = #tpu.dot_dimension_numbers<[1], [0], [0], [1], [0, 0, 1, 1], [], []>} : vector<64x4xbf16>, vector<4x4xbf16>, vector<64x4xf32> -> vector<64x4xf32>
    %36 = arith.addf %30, %35 : vector<64x4xf32>
    %37 = vector.extract_strided_slice %13 {offsets = [0, 0, 0], sizes = [8, 8, 4], strides = [1, 1, 1]} : vector<8x9x4xbf16> to vector<8x8x4xbf16>
    %38 = vector.shape_cast %37 : vector<8x8x4xbf16> to vector<64x4xbf16>
    %c4 = arith.constant 4 : index
    %c0_35 = arith.constant 0 : index
    %c0_36 = arith.constant 0 : index
    %39 = vector.load %arg8[%c4, %c0_35, %c0_36] : memref<9x4x4xbf16, #tpu.memory_space<vmem>>, vector<1x4x4xbf16>
    %40 = vector.shape_cast %39 : vector<1x4x4xbf16> to vector<4x4xbf16>
    %cst_37 = arith.constant dense<0.000000e+00> : vector<64x4xf32>
    %41 = tpu.matmul %38, %40, %cst_37 {dimension_numbers = #tpu.dot_dimension_numbers<[1], [0], [0], [1], [0, 0, 1, 1], [], []>} : vector<64x4xbf16>, vector<4x4xbf16>, vector<64x4xf32> -> vector<64x4xf32>
    %42 = arith.addf %36, %41 : vector<64x4xf32>
    %43 = vector.extract_strided_slice %11 {offsets = [0, 1, 0], sizes = [8, 8, 4], strides = [1, 1, 1]} : vector<8x9x4xbf16> to vector<8x8x4xbf16>
    %44 = vector.shape_cast %43 : vector<8x8x4xbf16> to vector<64x4xbf16>
    %c5 = arith.constant 5 : index
    %c0_38 = arith.constant 0 : index
    %c0_39 = arith.constant 0 : index
    %45 = vector.load %arg8[%c5, %c0_38, %c0_39] : memref<9x4x4xbf16, #tpu.memory_space<vmem>>, vector<1x4x4xbf16>
    %46 = vector.shape_cast %45 : vector<1x4x4xbf16> to vector<4x4xbf16>
    %cst_40 = arith.constant dense<0.000000e+00> : vector<64x4xf32>
    %47 = tpu.matmul %44, %46, %cst_40 {dimension_numbers = #tpu.dot_dimension_numbers<[1], [0], [0], [1], [0, 0, 1, 1], [], []>} : vector<64x4xbf16>, vector<4x4xbf16>, vector<64x4xf32> -> vector<64x4xf32>
    %48 = arith.addf %42, %47 : vector<64x4xf32>
    %49 = vector.extract_strided_slice %4 {offsets = [1, 0, 0], sizes = [8, 8, 4], strides = [1, 1, 1]} : vector<9x9x4xbf16> to vector<8x8x4xbf16>
    %50 = vector.shape_cast %49 : vector<8x8x4xbf16> to vector<64x4xbf16>
    %c6 = arith.constant 6 : index
    %c0_41 = arith.constant 0 : index
    %c0_42 = arith.constant 0 : index
    %51 = vector.load %arg8[%c6, %c0_41, %c0_42] : memref<9x4x4xbf16, #tpu.memory_space<vmem>>, vector<1x4x4xbf16>
    %52 = vector.shape_cast %51 : vector<1x4x4xbf16> to vector<4x4xbf16>
    %cst_43 = arith.constant dense<0.000000e+00> : vector<64x4xf32>
    %53 = tpu.matmul %50, %52, %cst_43 {dimension_numbers = #tpu.dot_dimension_numbers<[1], [0], [0], [1], [0, 0, 1, 1], [], []>} : vector<64x4xbf16>, vector<4x4xbf16>, vector<64x4xf32> -> vector<64x4xf32>
    %54 = arith.addf %48, %53 : vector<64x4xf32>
    %55 = vector.extract_strided_slice %9 {offsets = [1, 0, 0], sizes = [8, 8, 4], strides = [1, 1, 1]} : vector<9x9x4xbf16> to vector<8x8x4xbf16>
    %56 = vector.shape_cast %55 : vector<8x8x4xbf16> to vector<64x4xbf16>
    %c7 = arith.constant 7 : index
    %c0_44 = arith.constant 0 : index
    %c0_45 = arith.constant 0 : index
    %57 = vector.load %arg8[%c7, %c0_44, %c0_45] : memref<9x4x4xbf16, #tpu.memory_space<vmem>>, vector<1x4x4xbf16>
    %58 = vector.shape_cast %57 : vector<1x4x4xbf16> to vector<4x4xbf16>
    %cst_46 = arith.constant dense<0.000000e+00> : vector<64x4xf32>
    %59 = tpu.matmul %56, %58, %cst_46 {dimension_numbers = #tpu.dot_dimension_numbers<[1], [0], [0], [1], [0, 0, 1, 1], [], []>} : vector<64x4xbf16>, vector<4x4xbf16>, vector<64x4xf32> -> vector<64x4xf32>
    %60 = arith.addf %54, %59 : vector<64x4xf32>
    %61 = vector.extract_strided_slice %4 {offsets = [1, 1, 0], sizes = [8, 8, 4], strides = [1, 1, 1]} : vector<9x9x4xbf16> to vector<8x8x4xbf16>
    %62 = vector.shape_cast %61 : vector<8x8x4xbf16> to vector<64x4xbf16>
    %c8 = arith.constant 8 : index
    %c0_47 = arith.constant 0 : index
    %c0_48 = arith.constant 0 : index
    %63 = vector.load %arg8[%c8, %c0_47, %c0_48] : memref<9x4x4xbf16, #tpu.memory_space<vmem>>, vector<1x4x4xbf16>
    %64 = vector.shape_cast %63 : vector<1x4x4xbf16> to vector<4x4xbf16>
    %cst_49 = arith.constant dense<0.000000e+00> : vector<64x4xf32>
    %65 = tpu.matmul %62, %64, %cst_49 {dimension_numbers = #tpu.dot_dimension_numbers<[1], [0], [0], [1], [0, 0, 1, 1], [], []>} : vector<64x4xbf16>, vector<4x4xbf16>, vector<64x4xf32> -> vector<64x4xf32>
    %66 = arith.addf %60, %65 : vector<64x4xf32>
    %cst_50 = arith.constant dense<0.000000e+00> : vector<4xf32>
    %67 = vector.multi_reduction <add>, %66, %cst_50 [0] : vector<64x4xf32> to vector<4xf32>
    %68 = vector.shape_cast %67 : vector<4xf32> to vector<1x4xf32>
    %69 = arith.mulf %66, %66 : vector<64x4xf32>
    %cst_51 = arith.constant dense<0.000000e+00> : vector<4xf32>
    %70 = vector.multi_reduction <add>, %69, %cst_51 [0] : vector<64x4xf32> to vector<4xf32>
    %71 = vector.shape_cast %70 : vector<4xf32> to vector<1x4xf32>
    %72 = tpu.concatenate %68, %71 in 0 : vector<1x4xf32>, vector<1x4xf32> -> vector<2x4xf32>
    %c0_52 = arith.constant 0 : index
    %c0_53 = arith.constant 0 : index
    %c0_54 = arith.constant 0 : index
    %c0_55 = arith.constant 0 : index
    %73 = vector.load %arg10[%c0_52, %c0_53, %c0_54, %c0_55] : memref<1x1x2x4xf32, #tpu.memory_space<vmem>>, vector<1x1x2x4xf32>
    %74 = vector.shape_cast %73 : vector<1x1x2x4xf32> to vector<2x4xf32>
    %75 = vector.shape_cast %72 : vector<2x4xf32> to vector<1x1x2x4xf32>
    tpu.vector_store %arg10[%c0_52, %c0_53, %c0_54, %c0_55], %75 {strides = array<i32>} : memref<1x1x2x4xf32, #tpu.memory_space<vmem>>, vector<1x1x2x4xf32>,
    %76 = vector.shape_cast %66 : vector<64x4xf32> to vector<8x8x4xf32>
    %c0_56 = arith.constant 0 : index
    %c0_57 = arith.constant 0 : index
    %c0_58 = arith.constant 0 : index
    %c0_59 = arith.constant 0 : index
    %77 = vector.load %arg9[%c0_56, %c0_57, %c0_58, %c0_59] : memref<1x8x8x4xf32, #tpu.memory_space<vmem>>, vector<1x8x8x4xf32>
    %78 = vector.shape_cast %77 : vector<1x8x8x4xf32> to vector<8x8x4xf32>
    %79 = vector.shape_cast %76 : vector<8x8x4xf32> to vector<1x8x8x4xf32>
    tpu.vector_store %arg9[%c0_56, %c0_57, %c0_58, %c0_59], %79 {strides = array<i32>} : memref<1x8x8x4xf32, #tpu.memory_space<vmem>>, vector<1x8x8x4xf32>,
    return
  }
  func.func @transform_0(%arg0: i32, %arg1: i32) -> (i32, i32, i32, i32) {
    %c0_i32 = arith.constant 0 : i32
    %c0_i32_0 = arith.constant 0 : i32
    %c0_i32_1 = arith.constant 0 : i32
    return %arg0, %arg1, %c0_i32, %c0_i32_0 : i32, i32, i32, i32
  }
  func.func @transform_1(%arg0: i32, %arg1: i32) -> (i32, i32, i32, i32) {
    %c1_i32 = arith.constant 1 : i32
    %0 = arith.addi %arg1, %c1_i32 : i32
    %c8_i32 = arith.constant 8 : i32
    %1 = arith.muli %0, %c8_i32 : i32
    %c0_i32 = arith.constant 0 : i32
    %c0_i32_0 = arith.constant 0 : i32
    %c0_i32_1 = arith.constant 0 : i32
    return %arg0, %1, %c0_i32, %c0_i32_0 : i32, i32, i32, i32
  }
  func.func @transform_2(%arg0: i32, %arg1: i32) -> (i32, i32, i32, i32) {
    %c0_i32 = arith.constant 0 : i32
    %c0_i32_0 = arith.constant 0 : i32
    %c0_i32_1 = arith.constant 0 : i32
    return %arg0, %arg1, %c0_i32, %c0_i32_0 : i32, i32, i32, i32
  }
  func.func @transform_3(%arg0: i32, %arg1: i32) -> (i32, i32, i32, i32) {
    %c1_i32 = arith.constant 1 : i32
    %0 = arith.addi %arg1, %c1_i32 : i32
    %c8_i32 = arith.constant 8 : i32
    %1 = arith.muli %0, %c8_i32 : i32
    %c0_i32 = arith.constant 0 : i32
    %c0_i32_0 = arith.constant 0 : i32
    %c0_i32_1 = arith.constant 0 : i32
    return %arg0, %1, %c0_i32, %c0_i32_0 : i32, i32, i32, i32
  }
  func.func @transform_4(%arg0: i32, %arg1: i32) -> (i32, i32, i32, i32) {
    %c0_i32 = arith.constant 0 : i32
    %c0_i32_0 = arith.constant 0 : i32
    %c0_i32_1 = arith.constant 0 : i32
    return %arg0, %arg1, %c0_i32, %c0_i32_0 : i32, i32, i32, i32
  }
  func.func @transform_5(%arg0: i32, %arg1: i32) -> (i32, i32, i32, i32) {
    %c0_i32 = arith.constant 0 : i32
    %c0_i32_0 = arith.constant 0 : i32
    %c0_i32_1 = arith.constant 0 : i32
    return %arg0, %arg1, %c0_i32, %c0_i32_0 : i32, i32, i32, i32
  }
  func.func @transform_6(%arg0: i32, %arg1: i32) -> (i32, i32, i32) {
    %c0_i32 = arith.constant 0 : i32
    %c0_i32_0 = arith.constant 0 : i32
    %c0_i32_1 = arith.constant 0 : i32
    %c0_i32_2 = arith.constant 0 : i32
    return %c0_i32, %c0_i32_0, %c0_i32_1 : i32, i32, i32
  }
  func.func @transform_7(%arg0: i32, %arg1: i32) -> (i32, i32, i32, i32) {
    %c0_i32 = arith.constant 0 : i32
    %c0_i32_0 = arith.constant 0 : i32
    %c0_i32_1 = arith.constant 0 : i32
    return %arg0, %arg1, %c0_i32, %c0_i32_0 : i32, i32, i32, i32
  }
  func.func @transform_8(%arg0: i32, %arg1: i32) -> (i32, i32, i32, i32) {
    %c0_i32 = arith.constant 0 : i32
    %c0_i32_0 = arith.constant 0 : i32
    %c0_i32_1 = arith.constant 0 : i32
    return %arg0, %arg1, %c0_i32, %c0_i32_0 : i32, i32, i32, i32
  }
}

module attributes {stable_mosaic.version = 11 : i64} {
  func.func @bn_relu_kernel(%arg0: i32, %arg1: memref<16x32xf32, #tpu.memory_space<vmem>>, %arg2: memref<1x32xf32, #tpu.memory_space<vmem>>, %arg3: memref<1x32xf32, #tpu.memory_space<vmem>>, %arg4: memref<16x32xf32, #tpu.memory_space<vmem>>) attributes {dimension_semantics = [#tpu.dimension_semantics<parallel>], iteration_bounds = array<i64: 1>, scalar_prefetch = 0 : i64, scratch_operands = 0 : i64, tpu.core_type = #tpu.core_type<tc>, window_params = [{transform_indices = @transform_0, window_bounds = array<i64: 16, 32>}, {pipeline_mode = #tpu.pipeline_mode<synchronous>, transform_indices = @transform_1, window_bounds = array<i64: 1, 32>}, {pipeline_mode = #tpu.pipeline_mode<synchronous>, transform_indices = @transform_2, window_bounds = array<i64: 1, 32>}, {transform_indices = @transform_3, window_bounds = array<i64: 16, 32>}]} {
    %c0 = arith.constant 0 : index
    %c0_0 = arith.constant 0 : index
    %0 = vector.load %arg1[%c0, %c0_0] : memref<16x32xf32, #tpu.memory_space<vmem>>, vector<16x32xf32>
    %c0_1 = arith.constant 0 : index
    %c0_2 = arith.constant 0 : index
    %1 = vector.load %arg2[%c0_1, %c0_2] : memref<1x32xf32, #tpu.memory_space<vmem>>, vector<1x32xf32>
    %2 = vector.broadcast %1 : vector<1x32xf32> to vector<16x32xf32>
    %3 = arith.mulf %0, %2 : vector<16x32xf32>
    %c0_3 = arith.constant 0 : index
    %c0_4 = arith.constant 0 : index
    %4 = vector.load %arg3[%c0_3, %c0_4] : memref<1x32xf32, #tpu.memory_space<vmem>>, vector<1x32xf32>
    %5 = vector.broadcast %4 : vector<1x32xf32> to vector<16x32xf32>
    %6 = arith.addf %3, %5 : vector<16x32xf32>
    %cst = arith.constant 0.000000e+00 : f32
    %7 = vector.broadcast %cst : f32 to vector<16x32xf32>
    %8 = arith.maximumf %6, %7 : vector<16x32xf32>
    %c0_5 = arith.constant 0 : index
    %c0_6 = arith.constant 0 : index
    %9 = vector.load %arg4[%c0_5, %c0_6] : memref<16x32xf32, #tpu.memory_space<vmem>>, vector<16x32xf32>
    tpu.vector_store %arg4[%c0_5, %c0_6], %8 {strides = array<i32>} : memref<16x32xf32, #tpu.memory_space<vmem>>, vector<16x32xf32>,
    return
  }
  func.func @transform_0(%arg0: i32) -> (i32, i32) {
    %c0_i32 = arith.constant 0 : i32
    %c0_i32_0 = arith.constant 0 : i32
    return %arg0, %c0_i32 : i32, i32
  }
  func.func @transform_1(%arg0: i32) -> (i32, i32) {
    %c0_i32 = arith.constant 0 : i32
    %c0_i32_0 = arith.constant 0 : i32
    %c0_i32_1 = arith.constant 0 : i32
    return %c0_i32, %c0_i32_0 : i32, i32
  }
  func.func @transform_2(%arg0: i32) -> (i32, i32) {
    %c0_i32 = arith.constant 0 : i32
    %c0_i32_0 = arith.constant 0 : i32
    %c0_i32_1 = arith.constant 0 : i32
    return %c0_i32, %c0_i32_0 : i32, i32
  }
  func.func @transform_3(%arg0: i32) -> (i32, i32) {
    %c0_i32 = arith.constant 0 : i32
    %c0_i32_0 = arith.constant 0 : i32
    return %arg0, %c0_i32 : i32, i32
  }
}

</mosaic_0001>

<llo_original>
// kernel: tile.13
$region0: #{tile.13}
  #allocation0 [shape = 's32[1]{0}', space=sflag, size = 0x4, scoped, tag = 'scoped memory for tile.13']
  %s0 = inlined_call_operand.vmem [shape: f32[4], index: 0, kind: input, shape index: {}]
  %s1 = inlined_call_operand.vmem [shape: f32[8,4], index: 1, kind: output, shape index: {}]
  // Predicated region
  $region2: #{tile.13} parent=0 // pred_check
    _
  $region3: #{tile.13} parent=0 // pred_check_branch
    %3 = sbr.rel (0) target = $region5
  $region4: #{tile.13} parent=0 // pred_region
    _
  $region5: #{tile.13} parent=0 // pred_fallthru
    _
  %v4 = vld [vmem:[%s0] ss:$0 sm:$0xff]
  %5 = vst [vmem:[%s1] sm:$0xff] %v4

// kernel: tile.14
$region0: #{tile.14}
  %s0 = inlined_call_operand.vmem [shape: f32[8,4], index: 0, kind: input, shape index: {}]
  %s1 = inlined_call_operand.vmem [shape: f32[1,32], index: 1, kind: output, shape index: {}]
  $region1: #{tile.14} parent=0
    #allocation0 [shape = 'u8[4096]{0}', space=vmem, size = 0x1000, scoped, tag = 'scoped mem for output reshape']
    %v2 = vld [vmem:[%s0] sm:$0x1]
    %vm3 = vcmask 31744
    %4 = vst.msk [vmem:[#allocation0] sm:$0x1] %vm3, %v2
    %s5 = scalar_lea.vmem %s0, 7
    %v6 = vld [vmem:[%s5] sm:$0x1]
    %7 = vrot.lane.b32.xlu0 %v6, 28
    %v8 = vpop.permute.xlu0 %7
    %vm9 = vcmask 261344
    %10 = vst.msk [vmem:[#allocation0] sm:$0x1] %vm9, %v8
    %s11 = scalar_lea.vmem %s0, 6
    %v12 = vld [vmem:[%s11] sm:$0x1]
    %13 = vrot.lane.b32.xlu0 %v12, 24
    %v14 = vpop.permute.xlu0 %13
    %vm15 = vcmask 228544
    %16 = vst.msk [vmem:[#allocation0] sm:$0x1] %vm15, %v14
    %s17 = scalar_lea.vmem %s0, 5
    %v18 = vld [vmem:[%s17] sm:$0x1]
    %19 = vrot.lane.b32.xlu0 %v18, 20
    %v20 = vpop.permute.xlu0 %19
    %vm21 = vcmask 195744
    %22 = vst.msk [vmem:[#allocation0] sm:$0x1] %vm21, %v20
    %s23 = scalar_lea.vmem %s0, 4
    %v24 = vld [vmem:[%s23] sm:$0x1]
    %25 = vrot.lane.b32.xlu0 %v24, 16
    %v26 = vpop.permute.xlu0 %25
    %vm27 = vcmask 162944
    %28 = vst.msk [vmem:[#allocation0] sm:$0x1] %vm27, %v26
    %s29 = scalar_lea.vmem %s0, 3
    %v30 = vld [vmem:[%s29] sm:$0x1]
    %31 = vrot.lane.b32.xlu0 %v30, 12
    %v32 = vpop.permute.xlu0 %31
    %vm33 = vcmask 130144
    %34 = vst.msk [vmem:[#allocation0] sm:$0x1] %vm33, %v32
    %s35 = scalar_lea.vmem %s0, 2
    %v36 = vld [vmem:[%s35] sm:$0x1]
    %37 = vrot.lane.b32.xlu0 %v36, 8
    %v38 = vpop.permute.xlu0 %37
    %vm39 = vcmask 97344
    %40 = vst.msk [vmem:[#allocation0] sm:$0x1] %vm39, %v38
    %s41 = scalar_lea.vmem %s0, 1
    %v42 = vld [vmem:[%s41] sm:$0x1]
    %43 = vrot.lane.b32.xlu0 %v42, 4
    %v44 = vpop.permute.xlu0 %43
    %vm45 = vcmask 64544
    %46 = vst.msk [vmem:[#allocation0] sm:$0x1] %vm45, %v44
    %s48 = ssub.s32 2, 1
    %v49 = vld [vmem:[#allocation0] sm:%s48]
    %s51 = ssub.s32 2, 1
    %52 = vst [vmem:[%s1] sm:%s51] %v49

// kernel: downsampling_forward.3
$region0: #{downsampling_forward.3}
  #allocation0 [shape = 'u32[]', space=smem, size = 0x4, offset = 0x4, fixed_abs, tag = 'smem constant byte address 0x4 - core index']
  #allocation1 [shape = 'u32[72,128]{1,0:T(1,128)}', space=vmem, size = 0x9000, scoped, tag = 'internal scratch']
  %s0 = inlined_call_operand.vmem [shape: f32[16,32], index: 0, kind: input, shape index: {}]
  %s1 = inlined_call_operand.vmem [shape: f32[1,32], index: 1, kind: input, shape index: {}]
  %s2 = inlined_call_operand.vmem [shape: f32[1,32], index: 2, kind: input, shape index: {}]
  %s3 = inlined_call_operand.vmem [shape: f32[16,32], index: 3, kind: output, shape index: {}]
  %s4 = sld [smem:[#allocation0]]
  $region22: #{downsampling_forward.3} parent=0
    _
  %s6 = ssub.s32 1, %s4
  %s7 = scalar_select 0, %s6, %s4
  // Predicated region
  $region2: #{downsampling_forward.3} parent=0 // pred_check
    _
  $region3: #{downsampling_forward.3} parent=0 // pred_check_branch
    %9 = sbr.rel (0) target = $region5
  $region4: #{downsampling_forward.3} parent=0 // pred_region
    _
  $region5: #{downsampling_forward.3} parent=0 // pred_fallthru
    _
  // Predicated region
  $region6: #{downsampling_forward.3} parent=0 // pred_check
    _
  $region7: #{downsampling_forward.3} parent=0 // pred_check_branch
    %11 = sbr.rel (0) target = $region9
  $region8: #{downsampling_forward.3} parent=0 // pred_region
    _
  $region9: #{downsampling_forward.3} parent=0 // pred_fallthru
    _
  // Predicated region
  $region10: #{downsampling_forward.3} parent=0 // pred_check
    _
  $region11: #{downsampling_forward.3} parent=0 // pred_check_branch
    %13 = sbr.rel (0) target = $region13
  $region12: #{downsampling_forward.3} parent=0 // pred_region
    _
  $region13: #{downsampling_forward.3} parent=0 // pred_fallthru
    _
  %v14 = vld [vmem:[%s0] sm:$0xff]
  %v15 = vld [vmem:[%s0 + $0x8] sm:$0xff]
  %v16 = vld [vmem:[%s1] sm:$0x1]
  %v18 = vperm.slane %v16, 0
  %v20 = vmul.f32 %v14, %v18
  %v21 = vmul.f32 %v15, %v18
  %v22 = vld [vmem:[%s2] sm:$0x1]
  %v24 = vperm.slane %v22, 0
  %v26 = vadd.f32 %v20, %v24
  %v27 = vadd.f32 %v21, %v24
  %v28 = vmax.f32 %v26, 0.0
  %v29 = vmax.f32 %v27, 0.0
  %vm30 = vcmask 261120
  %31 = vst.msk [vmem:[%s3] sm:$0xff] %vm30, %v28
  %32 = vst.msk [vmem:[%s3 + $0x8] sm:$0xff] %vm30, %v29
  // Predicated region
  $region14: #{downsampling_forward.3} parent=0 // pred_check
    _
  $region15: #{downsampling_forward.3} parent=0 // pred_check_branch
    %34 = sbr.rel (0) target = $region17
  $region16: #{downsampling_forward.3} parent=0 // pred_region
    _
  $region17: #{downsampling_forward.3} parent=0 // pred_fallthru
    _
  // Predicated region
  $region18: #{downsampling_forward.3} parent=0 // pred_check
    _
  $region19: #{downsampling_forward.3} parent=0 // pred_check_branch
    %36 = sbr.rel (0) target = $region21
  $region20: #{downsampling_forward.3} parent=0 // pred_region
    _
  $region21: #{downsampling_forward.3} parent=0 // pred_fallthru
    _

// kernel: downsampling_forward.2
$region0: #{downsampling_forward.2}
  #allocation0 [shape = 'u32[]', space=smem, size = 0x4, offset = 0x4, fixed_abs, tag = 'smem constant byte address 0x4 - core index']
  #allocation1 [shape = 'u32[72,128]{1,0:T(1,128)}', space=vmem, size = 0x9000, scoped, tag = 'internal scratch']
  %s0 = inlined_call_operand.vmem [shape: bf16[2,9,9,4], index: 0, kind: input, shape index: {}, may-alias: {0,1}]
  %s1 = inlined_call_operand.vmem [shape: bf16[2,9,9,4], index: 1, kind: input, shape index: {}, may-alias: {0,1}]
  %s2 = inlined_call_operand.vmem [shape: bf16[2,9,9,4], index: 2, kind: input, shape index: {}, may-alias: {2,3}]
  %s3 = inlined_call_operand.vmem [shape: bf16[2,9,9,4], index: 3, kind: input, shape index: {}, may-alias: {2,3}]
  %s4 = inlined_call_operand.vmem [shape: bf16[2,9,9,4], index: 4, kind: input, shape index: {}]
  %s5 = inlined_call_operand.vmem [shape: bf16[2,9,9,4], index: 5, kind: input, shape index: {}]
  %s6 = inlined_call_operand.vmem [shape: bf16[9,4,4], index: 6, kind: input, shape index: {}]
  %s7 = inlined_call_operand.vmem [shape: f32[2,8,8,4], index: 7, kind: output, shape index: {0}]
  %s8 = inlined_call_operand.vmem [shape: f32[2,1,2,4], index: 8, kind: output, shape index: {1}]
  %9 = xla_tuple %s7, %s8
  %s10 = sld [smem:[#allocation0]]
  $region69: #{downsampling_forward.2} parent=0
    _
  %s12 = ssub.s32 1, %s10
  %s13 = scalar_select 0, %s12, %s10
  loop: start=0, step=1, limit=4
  $region2: #{downsampling_forward.2} parent=0 // loop_pre_header
    _
  $region3: #{downsampling_forward.2} parent=0 // loop_header
    %s15 = sphi 0, %s19
    %p16 = scmp.ge.s32.totalorder %s15, 4
    %s22 = sphi 0, %s34
    %s23 = sphi 0, %s30
    %s24 = sphi 0, %s22
    %s25 = sphi 0, %s23
    %s26 = sphi 0, %s24
    %s27 = sphi 0, %s25
    %s39 = sphi 0, %s41
    %s42 = sphi 0, %s39
    %s43 = sphi 0, %s42
    %s59 = sphi 0, %s43
    %s71 = sphi 0, %s73
    %s74 = sphi 0, %s71
    %s75 = sphi 0, %s74
    %s91 = sphi 0, %s75
    %s99 = sphi 0, %s101
    %s102 = sphi 0, %s99
    %s103 = sphi 0, %s102
    %s119 = sphi 0, %s103
    %s131 = sphi 0, %s133
    %s134 = sphi 0, %s131
    %s135 = sphi 0, %s134
    %s151 = sphi 0, %s135
    %s159 = sphi 0, %s161
    %s162 = sphi 0, %s159
    %s163 = sphi 0, %s162
    %s179 = sphi 0, %s163
    %s187 = sphi 0, %s189
    %s190 = sphi 0, %s187
    %s191 = sphi 0, %s190
    %s207 = sphi 0, %s191
    %s211 = sphi 0, %s211
    %s213 = sphi 0, %s211
    %s214 = sphi 0, %s213
    %s228 = sphi 0, %s214
    %s236 = sphi 0, %s238
    %s239 = sphi 0, %s236
    %s240 = sphi 0, %s239
    %s256 = sphi 0, %s240
    %s264 = sphi 0, %s266
    %s267 = sphi 0, %s264
    %s268 = sphi 0, %s267
    %s284 = sphi 0, %s268
  $region4: #{downsampling_forward.2} parent=0 // loop_header_branch
    %18 = sbr.rel (%p16) target = $region8
  $region5: #{downsampling_forward.2} parent=0 // loop_body
    %s20 = ssub.s32 %s15, 1
    %s21 = ssub.s32 %s15, 2
    %s28 = sadd.s32 1, %s23
    %p29 = scmp.ge.s32.totalorder %s28, 1
    %s30 = scalar_select %p29, 0, %s28
    %s31 = sadd.s32 1, %s22
    %s32 = scalar_select %p29, %s31, %s22
    %p33 = scmp.ge.s32.totalorder %s32, 2
    %s34 = scalar_select %p33, 0, %s32
    %s35 = ssub.s32 %s22, %s34
    %s36 = ssub.s32 %s23, %s30
    %s37 = sor.u32 %s35, %s36
    %p38 = scmp.eq.s32.totalorder %s37, 0
    %s40 = sadd.s32 %s39, 1
    %s41 = scalar_select %p38, %s39, %s40
    %p44 = pneg %p38
    %p45 = scmp.eq.s32.totalorder %s15, 1
    %p46 = por %p44, %p45
    %p47 = scmp.ne.s32.totalorder %s39, %s42
    %p48 = scmp.eq.s32.totalorder %s15, 0
    %p49 = por %p47, %p48
    %p50 = scmp.ne.s32.totalorder %s39, %s42
    %p51 = scmp.eq.s32.totalorder %s20, 1
    %p52 = por %p50, %p51
    %p53 = scmp.ne.s32.totalorder %s42, %s43
    %p54 = scmp.eq.s32.totalorder %s20, 0
    %p55 = por %p53, %p54
    %p56 = scmp.ne.s32.totalorder %s42, %s43
    %p57 = scmp.eq.s32.totalorder %s21, 1
    %p58 = por %p56, %p57
    %p60 = scmp.ne.s32.totalorder %s43, %s59
    %p61 = scmp.eq.s32.totalorder %s21, 0
    %p62 = por %p60, %p61
    %s63 = sadd.s32 %s23, 1
    %s64 = smul.u32 %s63, 8
    %s65 = sadd.s32 %s30, 1
    %s66 = smul.u32 %s65, 8
    %s67 = ssub.s32 %s22, %s34
    %s68 = ssub.s32 %s64, %s66
    %s69 = sor.u32 %s67, %s68
    %p70 = scmp.eq.s32.totalorder %s69, 0
    %s72 = sadd.s32 %s71, 1
    %s73 = scalar_select %p70, %s71, %s72
    %p76 = pneg %p70
    %p77 = scmp.eq.s32.totalorder %s15, 1
    %p78 = por %p76, %p77
    %p79 = scmp.ne.s32.totalorder %s71, %s74
    %p80 = scmp.eq.s32.totalorder %s15, 0
    %p81 = por %p79, %p80
    %p82 = scmp.ne.s32.totalorder %s71, %s74
    %p83 = scmp.eq.s32.totalorder %s20, 1
    %p84 = por %p82, %p83
    %p85 = scmp.ne.s32.totalorder %s74, %s75
    %p86 = scmp.eq.s32.totalorder %s20, 0
    %p87 = por %p85, %p86
    %p88 = scmp.ne.s32.totalorder %s74, %s75
    %p89 = scmp.eq.s32.totalorder %s21, 1
    %p90 = por %p88, %p89
    %p92 = scmp.ne.s32.totalorder %s75, %s91
    %p93 = scmp.eq.s32.totalorder %s21, 0
    %p94 = por %p92, %p93
    %s95 = ssub.s32 %s22, %s34
    %s96 = ssub.s32 %s23, %s30
    %s97 = sor.u32 %s95, %s96
    %p98 = scmp.eq.s32.totalorder %s97, 0
    %s100 = sadd.s32 %s99, 1
    %s101 = scalar_select %p98, %s99, %s100
    %p104 = pneg %p98
    %p105 = scmp.eq.s32.totalorder %s15, 1
    %p106 = por %p104, %p105
    %p107 = scmp.ne.s32.totalorder %s99, %s102
    %p108 = scmp.eq.s32.totalorder %s15, 0
    %p109 = por %p107, %p108
    %p110 = scmp.ne.s32.totalorder %s99, %s102
    %p111 = scmp.eq.s32.totalorder %s20, 1
    %p112 = por %p110, %p111
    %p113 = scmp.ne.s32.totalorder %s102, %s103
    %p114 = scmp.eq.s32.totalorder %s20, 0
    %p115 = por %p113, %p114
    %p116 = scmp.ne.s32.totalorder %s102, %s103
    %p117 = scmp.eq.s32.totalorder %s21, 1
    %p118 = por %p116, %p117
    %p120 = scmp.ne.s32.totalorder %s103, %s119
    %p121 = scmp.eq.s32.totalorder %s21, 0
    %p122 = por %p120, %p121
    %s123 = sadd.s32 %s23, 1
    %s124 = smul.u32 %s123, 8
    %s125 = sadd.s32 %s30, 1
    %s126 = smul.u32 %s125, 8
    %s127 = ssub.s32 %s22, %s34
    %s128 = ssub.s32 %s124, %s126
    %s129 = sor.u32 %s127, %s128
    %p130 = scmp.eq.s32.totalorder %s129, 0
    %s132 = sadd.s32 %s131, 1
    %s133 = scalar_select %p130, %s131, %s132
    %p136 = pneg %p130
    %p137 = scmp.eq.s32.totalorder %s15, 1
    %p138 = por %p136, %p137
    %p139 = scmp.ne.s32.totalorder %s131, %s134
    %p140 = scmp.eq.s32.totalorder %s15, 0
    %p141 = por %p139, %p140
    %p142 = scmp.ne.s32.totalorder %s131, %s134
    %p143 = scmp.eq.s32.totalorder %s20, 1
    %p144 = por %p142, %p143
    %p145 = scmp.ne.s32.totalorder %s134, %s135
    %p146 = scmp.eq.s32.totalorder %s20, 0
    %p147 = por %p145, %p146
    %p148 = scmp.ne.s32.totalorder %s134, %s135
    %p149 = scmp.eq.s32.totalorder %s21, 1
    %p150 = por %p148, %p149
    %p152 = scmp.ne.s32.totalorder %s135, %s151
    %p153 = scmp.eq.s32.totalorder %s21, 0
    %p154 = por %p152, %p153
    %s155 = ssub.s32 %s22, %s34
    %s156 = ssub.s32 %s23, %s30
    %s157 = sor.u32 %s155, %s156
    %p158 = scmp.eq.s32.totalorder %s157, 0
    %s160 = sadd.s32 %s159, 1
    %s161 = scalar_select %p158, %s159, %s160
    %p164 = pneg %p158
    %p165 = scmp.eq.s32.totalorder %s15, 1
    %p166 = por %p164, %p165
    %p167 = scmp.ne.s32.totalorder %s159, %s162
    %p168 = scmp.eq.s32.totalorder %s15, 0
    %p169 = por %p167, %p168
    %p170 = scmp.ne.s32.totalorder %s159, %s162
    %p171 = scmp.eq.s32.totalorder %s20, 1
    %p172 = por %p170, %p171
    %p173 = scmp.ne.s32.totalorder %s162, %s163
    %p174 = scmp.eq.s32.totalorder %s20, 0
    %p175 = por %p173, %p174
    %p176 = scmp.ne.s32.totalorder %s162, %s163
    %p177 = scmp.eq.s32.totalorder %s21, 1
    %p178 = por %p176, %p177
    %p180 = scmp.ne.s32.totalorder %s163, %s179
    %p181 = scmp.eq.s32.totalorder %s21, 0
    %p182 = por %p180, %p181
    %s183 = ssub.s32 %s22, %s34
    %s184 = ssub.s32 %s23, %s30
    %s185 = sor.u32 %s183, %s184
    %p186 = scmp.eq.s32.totalorder %s185, 0
    %s188 = sadd.s32 %s187, 1
    %s189 = scalar_select %p186, %s187, %s188
    %p192 = pneg %p186
    %p193 = scmp.eq.s32.totalorder %s15, 1
    %p194 = por %p192, %p193
    %p195 = scmp.ne.s32.totalorder %s187, %s190
    %p196 = scmp.eq.s32.totalorder %s15, 0
    %p197 = por %p195, %p196
    %p198 = scmp.ne.s32.totalorder %s187, %s190
    %p199 = scmp.eq.s32.totalorder %s20, 1
    %p200 = por %p198, %p199
    %p201 = scmp.ne.s32.totalorder %s190, %s191
    %p202 = scmp.eq.s32.totalorder %s20, 0
    %p203 = por %p201, %p202
    %p204 = scmp.ne.s32.totalorder %s190, %s191
    %p205 = scmp.eq.s32.totalorder %s21, 1
    %p206 = por %p204, %p205
    %p208 = scmp.ne.s32.totalorder %s191, %s207
    %p209 = scmp.eq.s32.totalorder %s21, 0
    %p210 = por %p208, %p209
    %s212 = sadd.s32 %s211, 1
    %p215 = scmp.eq.s32.totalorder %s15, 1
    %p216 = scmp.ne.s32.totalorder %s211, %s213
    %p217 = scmp.eq.s32.totalorder %s15, 0
    %p218 = por %p216, %p217
    %p219 = scmp.ne.s32.totalorder %s211, %s213
    %p220 = scmp.eq.s32.totalorder %s20, 1
    %p221 = por %p219, %p220
    %p222 = scmp.ne.s32.totalorder %s213, %s214
    %p223 = scmp.eq.s32.totalorder %s20, 0
    %p224 = por %p222, %p223
    %p225 = scmp.ne.s32.totalorder %s213, %s214
    %p226 = scmp.eq.s32.totalorder %s21, 1
    %p227 = por %p225, %p226
    %p229 = scmp.ne.s32.totalorder %s214, %s228
    %p230 = scmp.eq.s32.totalorder %s21, 0
    %p231 = por %p229, %p230
    %s232 = ssub.s32 %s22, %s34
    %s233 = ssub.s32 %s23, %s30
    %s234 = sor.u32 %s232, %s233
    %p235 = scmp.eq.s32.totalorder %s234, 0
    %s237 = sadd.s32 %s236, 1
    %s238 = scalar_select %p235, %s236, %s237
    %p241 = pneg %p235
    %p242 = scmp.eq.s32.totalorder %s15, 1
    %p243 = por %p241, %p242
    %p244 = scmp.ne.s32.totalorder %s236, %s239
    %p245 = scmp.eq.s32.totalorder %s15, 0
    %p246 = por %p244, %p245
    %p247 = scmp.ne.s32.totalorder %s236, %s239
    %p248 = scmp.eq.s32.totalorder %s20, 1
    %p249 = por %p247, %p248
    %p250 = scmp.ne.s32.totalorder %s239, %s240
    %p251 = scmp.eq.s32.totalorder %s20, 0
    %p252 = por %p250, %p251
    %p253 = scmp.ne.s32.totalorder %s239, %s240
    %p254 = scmp.eq.s32.totalorder %s21, 1
    %p255 = por %p253, %p254
    %p257 = scmp.ne.s32.totalorder %s240, %s256
    %p258 = scmp.eq.s32.totalorder %s21, 0
    %p259 = por %p257, %p258
    %s260 = ssub.s32 %s22, %s34
    %s261 = ssub.s32 %s23, %s30
    %s262 = sor.u32 %s260, %s261
    %p263 = scmp.eq.s32.totalorder %s262, 0
    %s265 = sadd.s32 %s264, 1
    %s266 = scalar_select %p263, %s264, %s265
    %p269 = pneg %p263
    %p270 = scmp.eq.s32.totalorder %s15, 1
    %p271 = por %p269, %p270
    %p272 = scmp.ne.s32.totalorder %s264, %s267
    %p273 = scmp.eq.s32.totalorder %s15, 0
    %p274 = por %p272, %p273
    %p275 = scmp.ne.s32.totalorder %s264, %s267
    %p276 = scmp.eq.s32.totalorder %s20, 1
    %p277 = por %p275, %p276
    %p278 = scmp.ne.s32.totalorder %s267, %s268
    %p279 = scmp.eq.s32.totalorder %s20, 0
    %p280 = por %p278, %p279
    %p281 = scmp.ne.s32.totalorder %s267, %s268
    %p282 = scmp.eq.s32.totalorder %s21, 1
    %p283 = por %p281, %p282
    %p285 = scmp.ne.s32.totalorder %s268, %s284
    %p286 = scmp.eq.s32.totalorder %s21, 0
    %p287 = por %p285, %p286
    %p288 = scmp.le.s32.totalorder 1, %s15
    %p289 = scmp.lt.s32.totalorder %s15, 3
    %p290 = pnand %p288, %p289
    %p291 = pneg %p290
    // Predicated region
    $region9: #{downsampling_forward.2} parent=5 // pred_check
      _
    $region10: #{downsampling_forward.2} parent=5 // pred_check_branch
      %293 = sbr.rel (%p290) target = $region12
    $region11: #{downsampling_forward.2} parent=5 // pred_region
      %s294 = ssub.s32 %s15, 1
      // Predicated region
      $region13: #{downsampling_forward.2} parent=11 // pred_check
        %p295 = pneg %p224
      $region14: #{downsampling_forward.2} parent=11 // pred_check_branch
        %297 = sbr.rel (%p295) target = $region16
      $region15: #{downsampling_forward.2} parent=11 // pred_region
        _
      $region16: #{downsampling_forward.2} parent=11 // pred_fallthru
        _
    $region12: #{downsampling_forward.2} parent=5 // pred_fallthru
      _
    %p298 = scmp.lt.s32.totalorder %s15, 2
    // Predicated region
    $region17: #{downsampling_forward.2} parent=5 // pred_check
      %p299 = pneg %p298
    $region18: #{downsampling_forward.2} parent=5 // pred_check_branch
      %301 = sbr.rel (%p299) target = $region20
    $region19: #{downsampling_forward.2} parent=5 // pred_region
      // Predicated region
      $region21: #{downsampling_forward.2} parent=19 // pred_check
        %p302 = pneg %p49
      $region22: #{downsampling_forward.2} parent=19 // pred_check_branch
        %304 = sbr.rel (%p302) target = $region24
      $region23: #{downsampling_forward.2} parent=19 // pred_region
        %s305 = smul.u32 8, %s23
        %s306 = ssub.s32 9, %s305
        %p307 = scmp.lt.s32.totalorder %s306, 8
        %s308 = scalar_select %p307, %s306, 8
        %s309 = smul.u32 4, %s308
        %s310 = smul.u32 %s309, 2
        %p311 = scmp.lt.s32.totalorder %s22, 1
        %s312 = scalar_select %p311, %s22, 1
        %p313 = scmp.lt.s32.totalorder %s305, 8
        %s314 = scalar_select %p313, %s305, 8
        %s315 = smul.addr %s314, 2
        %s316 = smul.addr %s312, 18
        %s317 = sadd.s32 %s315, %s316
        %s318 = smul.addr %s317, 4
        %s319 = scalar_lea.vmem %s0, %s318
        %s320 = smul.u32 8, %s23
        %s321 = ssub.s32 9, %s320
        %p322 = scmp.lt.s32.totalorder %s321, 8
        %s323 = scalar_select %p322, %s321, 8
        %s324 = smul.u32 4, %s323
        %s325 = smul.u32 %s324, 2
      $region24: #{downsampling_forward.2} parent=19 // pred_fallthru
        _
      // Predicated region
      $region25: #{downsampling_forward.2} parent=19 // pred_check
        %p326 = pneg %p81
      $region26: #{downsampling_forward.2} parent=19 // pred_check_branch
        %328 = sbr.rel (%p326) target = $region28
      $region27: #{downsampling_forward.2} parent=19 // pred_region
        %s329 = sadd.s32 %s23, 1
        %s330 = smul.u32 %s329, 8
        %p331 = scmp.lt.s32.totalorder %s22, 1
        %s332 = scalar_select %p331, %s22, 1
        %p333 = scmp.lt.s32.totalorder %s330, 8
        %s334 = scalar_select %p333, %s330, 8
        %s335 = smul.addr %s334, 2
        %s336 = smul.addr %s332, 18
        %s337 = sadd.s32 %s335, %s336
        %s338 = smul.addr %s337, 4
        %s339 = scalar_lea.vmem %s1, %s338
        %s340 = sadd.s32 %s23, 1
        %s341 = smul.u32 %s340, 8
      $region28: #{downsampling_forward.2} parent=19 // pred_fallthru
        _
      // Predicated region
      $region29: #{downsampling_forward.2} parent=19 // pred_check
        %p342 = pneg %p109
      $region30: #{downsampling_forward.2} parent=19 // pred_check_branch
        %344 = sbr.rel (%p342) target = $region32
      $region31: #{downsampling_forward.2} parent=19 // pred_region
        %s345 = smul.u32 8, %s23
        %s346 = ssub.s32 9, %s345
        %p347 = scmp.lt.s32.totalorder %s346, 8
        %s348 = scalar_select %p347, %s346, 8
        %s349 = smul.u32 4, %s348
        %s350 = smul.u32 %s349, 2
        %p351 = scmp.lt.s32.totalorder %s22, 1
        %s352 = scalar_select %p351, %s22, 1
        %p353 = scmp.lt.s32.totalorder %s345, 8
        %s354 = scalar_select %p353, %s345, 8
        %s355 = smul.addr %s354, 2
        %s356 = smul.addr %s352, 18
        %s357 = sadd.s32 %s355, %s356
        %s358 = smul.addr %s357, 4
        %s359 = scalar_lea.vmem %s2, %s358
        %s360 = smul.u32 8, %s23
        %s361 = ssub.s32 9, %s360
        %p362 = scmp.lt.s32.totalorder %s361, 8
        %s363 = scalar_select %p362, %s361, 8
        %s364 = smul.u32 4, %s363
        %s365 = smul.u32 %s364, 2
      $region32: #{downsampling_forward.2} parent=19 // pred_fallthru
        _
      // Predicated region
      $region33: #{downsampling_forward.2} parent=19 // pred_check
        %p366 = pneg %p141
      $region34: #{downsampling_forward.2} parent=19 // pred_check_branch
        %368 = sbr.rel (%p366) target = $region36
      $region35: #{downsampling_forward.2} parent=19 // pred_region
        %s369 = sadd.s32 %s23, 1
        %s370 = smul.u32 %s369, 8
        %p371 = scmp.lt.s32.totalorder %s22, 1
        %s372 = scalar_select %p371, %s22, 1
        %p373 = scmp.lt.s32.totalorder %s370, 8
        %s374 = scalar_select %p373, %s370, 8
        %s375 = smul.addr %s374, 2
        %s376 = smul.addr %s372, 18
        %s377 = sadd.s32 %s375, %s376
        %s378 = smul.addr %s377, 4
        %s379 = scalar_lea.vmem %s3, %s378
        %s380 = sadd.s32 %s23, 1
        %s381 = smul.u32 %s380, 8
      $region36: #{downsampling_forward.2} parent=19 // pred_fallthru
        _
      // Predicated region
      $region37: #{downsampling_forward.2} parent=19 // pred_check
        %p382 = pneg %p169
      $region38: #{downsampling_forward.2} parent=19 // pred_check_branch
        %384 = sbr.rel (%p382) target = $region40
      $region39: #{downsampling_forward.2} parent=19 // pred_region
        %s385 = smul.u32 8, %s23
        %s386 = ssub.s32 9, %s385
        %p387 = scmp.lt.s32.totalorder %s386, 8
        %s388 = scalar_select %p387, %s386, 8
        %s389 = smul.u32 4, %s388
        %s390 = smul.u32 %s389, 2
        %p391 = scmp.lt.s32.totalorder %s22, 1
        %s392 = scalar_select %p391, %s22, 1
        %p393 = scmp.lt.s32.totalorder %s385, 8
        %s394 = scalar_select %p393, %s385, 8
        %s395 = smul.addr %s394, 2
        %s396 = smul.addr %s392, 18
        %s397 = sadd.s32 %s395, %s396
        %s398 = smul.addr %s397, 4
        %s399 = scalar_lea.vmem %s4, %s398
        %s400 = smul.u32 8, %s23
        %s401 = ssub.s32 9, %s400
        %p402 = scmp.lt.s32.totalorder %s401, 8
        %s403 = scalar_select %p402, %s401, 8
        %s404 = smul.u32 4, %s403
        %s405 = smul.u32 %s404, 2
      $region40: #{downsampling_forward.2} parent=19 // pred_fallthru
        _
      // Predicated region
      $region41: #{downsampling_forward.2} parent=19 // pred_check
        %p406 = pneg %p197
      $region42: #{downsampling_forward.2} parent=19 // pred_check_branch
        %408 = sbr.rel (%p406) target = $region44
      $region43: #{downsampling_forward.2} parent=19 // pred_region
        %s409 = smul.u32 8, %s23
        %s410 = ssub.s32 9, %s409
        %p411 = scmp.lt.s32.totalorder %s410, 8
        %s412 = scalar_select %p411, %s410, 8
        %s413 = smul.u32 4, %s412
        %s414 = smul.u32 %s413, 2
        %p415 = scmp.lt.s32.totalorder %s22, 1
        %s416 = scalar_select %p415, %s22, 1
        %p417 = scmp.lt.s32.totalorder %s409, 8
        %s418 = scalar_select %p417, %s409, 8
        %s419 = smul.addr %s418, 2
        %s420 = smul.addr %s416, 18
        %s421 = sadd.s32 %s419, %s420
        %s422 = smul.addr %s421, 4
        %s423 = scalar_lea.vmem %s5, %s422
        %s424 = smul.u32 8, %s23
        %s425 = ssub.s32 9, %s424
        %p426 = scmp.lt.s32.totalorder %s425, 8
        %s427 = scalar_select %p426, %s425, 8
        %s428 = smul.u32 4, %s427
        %s429 = smul.u32 %s428, 2
      $region44: #{downsampling_forward.2} parent=19 // pred_fallthru
        _
    $region20: #{downsampling_forward.2} parent=5 // pred_fallthru
      _
    %p430 = scmp.le.s32.totalorder 1, %s15
    %p431 = scmp.lt.s32.totalorder %s15, 3
    %p432 = pnand %p430, %p431
    %p433 = pneg %p432
    // Predicated region
    $region45: #{downsampling_forward.2} parent=5 // pred_check
      _
    $region46: #{downsampling_forward.2} parent=5 // pred_check_branch
      %435 = sbr.rel (%p432) target = $region48
    $region47: #{downsampling_forward.2} parent=5 // pred_region
      %s436 = ssub.s32 %s15, 1
      %s437 = smul.u32 8, %s25
      %s438 = ssub.s32 9, %s437
      %p439 = scmp.lt.s32.totalorder %s438, 8
      %s440 = scalar_select %p439, %s438, 8
      %s441 = smul.u32 4, %s440
      %s442 = smul.u32 %s441, 2
      %p443 = scmp.lt.s32.totalorder %s24, 1
      %s444 = scalar_select %p443, %s24, 1
      %p445 = scmp.lt.s32.totalorder %s437, 8
      %s446 = scalar_select %p445, %s437, 8
      %s447 = smul.addr %s446, 2
      %s448 = smul.addr %s444, 18
      %s449 = sadd.s32 %s447, %s448
      %s450 = smul.addr %s449, 4
      %s451 = scalar_lea.vmem %s0, %s450
      %p452 = pneg %p55
      %p453 = pneg %p52
      %s454 = sadd.s32 %s25, 1
      %s455 = smul.u32 %s454, 8
      %p456 = scmp.lt.s32.totalorder %s24, 1
      %s457 = scalar_select %p456, %s24, 1
      %p458 = scmp.lt.s32.totalorder %s455, 8
      %s459 = scalar_select %p458, %s455, 8
      %s460 = smul.addr %s459, 2
      %s461 = smul.addr %s457, 18
      %s462 = sadd.s32 %s460, %s461
      %s463 = smul.addr %s462, 4
      %s464 = scalar_lea.vmem %s1, %s463
      %p465 = pneg %p87
      %p466 = pneg %p84
      %s467 = smul.u32 8, %s25
      %s468 = ssub.s32 9, %s467
      %p469 = scmp.lt.s32.totalorder %s468, 8
      %s470 = scalar_select %p469, %s468, 8
      %s471 = smul.u32 4, %s470
      %s472 = smul.u32 %s471, 2
      %p473 = scmp.lt.s32.totalorder %s24, 1
      %s474 = scalar_select %p473, %s24, 1
      %p475 = scmp.lt.s32.totalorder %s467, 8
      %s476 = scalar_select %p475, %s467, 8
      %s477 = smul.addr %s476, 2
      %s478 = smul.addr %s474, 18
      %s479 = sadd.s32 %s477, %s478
      %s480 = smul.addr %s479, 4
      %s481 = scalar_lea.vmem %s2, %s480
      %p482 = pneg %p115
      %p483 = pneg %p112
      %s484 = sadd.s32 %s25, 1
      %s485 = smul.u32 %s484, 8
      %p486 = scmp.lt.s32.totalorder %s24, 1
      %s487 = scalar_select %p486, %s24, 1
      %p488 = scmp.lt.s32.totalorder %s485, 8
      %s489 = scalar_select %p488, %s485, 8
      %s490 = smul.addr %s489, 2
      %s491 = smul.addr %s487, 18
      %s492 = sadd.s32 %s490, %s491
      %s493 = smul.addr %s492, 4
      %s494 = scalar_lea.vmem %s3, %s493
      %p495 = pneg %p147
      %p496 = pneg %p144
      %s497 = smul.u32 8, %s25
      %s498 = ssub.s32 9, %s497
      %p499 = scmp.lt.s32.totalorder %s498, 8
      %s500 = scalar_select %p499, %s498, 8
      %s501 = smul.u32 4, %s500
      %s502 = smul.u32 %s501, 2
      %p503 = scmp.lt.s32.totalorder %s24, 1
      %s504 = scalar_select %p503, %s24, 1
      %p505 = scmp.lt.s32.totalorder %s497, 8
      %s506 = scalar_select %p505, %s497, 8
      %s507 = smul.addr %s506, 2
      %s508 = smul.addr %s504, 18
      %s509 = sadd.s32 %s507, %s508
      %s510 = smul.addr %s509, 4
      %s511 = scalar_lea.vmem %s4, %s510
      %p512 = pneg %p175
      %p513 = pneg %p172
      %s514 = smul.u32 8, %s25
      %s515 = ssub.s32 9, %s514
      %p516 = scmp.lt.s32.totalorder %s515, 8
      %s517 = scalar_select %p516, %s515, 8
      %s518 = smul.u32 4, %s517
      %s519 = smul.u32 %s518, 2
      %p520 = scmp.lt.s32.totalorder %s24, 1
      %s521 = scalar_select %p520, %s24, 1
      %p522 = scmp.lt.s32.totalorder %s514, 8
      %s523 = scalar_select %p522, %s514, 8
      %s524 = smul.addr %s523, 2
      %s525 = smul.addr %s521, 18
      %s526 = sadd.s32 %s524, %s525
      %s527 = smul.addr %s526, 4
      %s528 = scalar_lea.vmem %s5, %s527
      %p529 = pneg %p203
      %p530 = pneg %p200
      %p531 = pneg %p224
      %p532 = pneg %p221
      %p533 = pneg %p252
      %p534 = pneg %p249
      %s535 = smul.u32 8, %s25
      %p536 = scmp.lt.s32.totalorder %s24, 1
      %s537 = scalar_select %p536, %s24, 1
      %p538 = scmp.lt.s32.totalorder %s535, 7
      %s539 = scalar_select %p538, %s535, 7
      %s540 = smul.addr %s537, 8
      %s541 = sadd.s32 %s539, %s540
      %s542 = smul.addr %s541, 8
      %s543 = scalar_lea.vmem %s7, %s542
      %p544 = pneg %p280
      %p545 = pneg %p277
      %p546 = scmp.lt.s32.totalorder %s24, 1
      %s547 = scalar_select %p546, %s24, 1
      %p548 = scmp.lt.s32.totalorder %s25, 0
      %s549 = scalar_select %p548, %s25, 0
      %s550 = sadd.s32 %s549, %s547
      %s551 = smul.addr %s550, 2
      %s552 = scalar_lea.vmem %s8, %s551
      %s553 = smul.u32 8, %s25
      %s554 = ssub.s32 9, %s553
      %p555 = scmp.lt.s32.totalorder %s554, 8
      %s556 = scalar_select %p555, %s554, 8
      %s557 = smul.u32 4, %s556
      %s558 = smul.u32 %s557, 2
      %p559 = scmp.lt.s32.totalorder %s24, 1
      %s560 = scalar_select %p559, %s24, 1
      %p561 = scmp.lt.s32.totalorder %s553, 8
      %s562 = scalar_select %p561, %s553, 8
      %s563 = smul.addr %s562, 2
      %s564 = smul.addr %s560, 18
      %s565 = sadd.s32 %s563, %s564
      %s566 = smul.addr %s565, 4
      %s567 = scalar_lea.vmem %s0, %s566
      %s568 = smul.u32 8, %s25
      %s569 = ssub.s32 9, %s568
      %p570 = scmp.lt.s32.totalorder %s569, 8
      %s571 = scalar_select %p570, %s569, 8
      %s572 = smul.u32 4, %s571
      %s573 = smul.u32 %s572, 2
      %s574 = sadd.s32 %s25, 1
      %s575 = smul.u32 %s574, 8
      %p576 = scmp.lt.s32.totalorder %s24, 1
      %s577 = scalar_select %p576, %s24, 1
      %p578 = scmp.lt.s32.totalorder %s575, 8
      %s579 = scalar_select %p578, %s575, 8
      %s580 = smul.addr %s579, 2
      %s581 = smul.addr %s577, 18
      %s582 = sadd.s32 %s580, %s581
      %s583 = smul.addr %s582, 4
      %s584 = scalar_lea.vmem %s1, %s583
      %s585 = sadd.s32 %s25, 1
      %s586 = smul.u32 %s585, 8
      %s587 = smul.u32 8, %s25
      %s588 = ssub.s32 9, %s587
      %p589 = scmp.lt.s32.totalorder %s588, 8
      %s590 = scalar_select %p589, %s588, 8
      %s591 = smul.u32 4, %s590
      %s592 = smul.u32 %s591, 2
      %p593 = scmp.lt.s32.totalorder %s24, 1
      %s594 = scalar_select %p593, %s24, 1
      %p595 = scmp.lt.s32.totalorder %s587, 8
      %s596 = scalar_select %p595, %s587, 8
      %s597 = smul.addr %s596, 2
      %s598 = smul.addr %s594, 18
      %s599 = sadd.s32 %s597, %s598
      %s600 = smul.addr %s599, 4
      %s601 = scalar_lea.vmem %s2, %s600
      %s602 = smul.u32 8, %s25
      %s603 = ssub.s32 9, %s602
      %p604 = scmp.lt.s32.totalorder %s603, 8
      %s605 = scalar_select %p604, %s603, 8
      %s606 = smul.u32 4, %s605
      %s607 = smul.u32 %s606, 2
      %s608 = sadd.s32 %s25, 1
      %s609 = smul.u32 %s608, 8
      %p610 = scmp.lt.s32.totalorder %s24, 1
      %s611 = scalar_select %p610, %s24, 1
      %p612 = scmp.lt.s32.totalorder %s609, 8
      %s613 = scalar_select %p612, %s609, 8
      %s614 = smul.addr %s613, 2
      %s615 = smul.addr %s611, 18
      %s616 = sadd.s32 %s614, %s615
      %s617 = smul.addr %s616, 4
      %s618 = scalar_lea.vmem %s3, %s617
      %s619 = sadd.s32 %s25, 1
      %s620 = smul.u32 %s619, 8
      %s621 = smul.u32 8, %s25
      %s622 = ssub.s32 9, %s621
      %p623 = scmp.lt.s32.totalorder %s622, 8
      %s624 = scalar_select %p623, %s622, 8
      %s625 = smul.u32 4, %s624
      %s626 = smul.u32 %s625, 2
      %p627 = scmp.lt.s32.totalorder %s24, 1
      %s628 = scalar_select %p627, %s24, 1
      %p629 = scmp.lt.s32.totalorder %s621, 8
      %s630 = scalar_select %p629, %s621, 8
      %s631 = smul.addr %s630, 2
      %s632 = smul.addr %s628, 18
      %s633 = sadd.s32 %s631, %s632
      %s634 = smul.addr %s633, 4
      %s635 = scalar_lea.vmem %s4, %s634
      %s636 = smul.u32 8, %s25
      %s637 = ssub.s32 9, %s636
      %p638 = scmp.lt.s32.totalorder %s637, 8
      %s639 = scalar_select %p638, %s637, 8
      %s640 = smul.u32 4, %s639
      %s641 = smul.u32 %s640, 2
      %s642 = smul.u32 8, %s25
      %s643 = ssub.s32 9, %s642
      %p644 = scmp.lt.s32.totalorder %s643, 8
      %s645 = scalar_select %p644, %s643, 8
      %s646 = smul.u32 4, %s645
      %s647 = smul.u32 %s646, 2
      %p648 = scmp.lt.s32.totalorder %s24, 1
      %s649 = scalar_select %p648, %s24, 1
      %p650 = scmp.lt.s32.totalorder %s642, 8
      %s651 = scalar_select %p650, %s642, 8
      %s652 = smul.addr %s651, 2
      %s653 = smul.addr %s649, 18
      %s654 = sadd.s32 %s652, %s653
      %s655 = smul.addr %s654, 4
      %s656 = scalar_lea.vmem %s5, %s655
      %s657 = smul.u32 8, %s25
      %s658 = ssub.s32 9, %s657
      %p659 = scmp.lt.s32.totalorder %s658, 8
      %s660 = scalar_select %p659, %s658, 8
      %s661 = smul.u32 4, %s660
      %s662 = smul.u32 %s661, 2
      %s663 = smul.u32 8, %s25
      %p664 = scmp.lt.s32.totalorder %s24, 1
      %s665 = scalar_select %p664, %s24, 1
      %p666 = scmp.lt.s32.totalorder %s663, 7
      %s667 = scalar_select %p666, %s663, 7
      %s668 = smul.addr %s665, 8
      %s669 = sadd.s32 %s667, %s668
      %s670 = smul.addr %s669, 8
      %s671 = scalar_lea.vmem %s7, %s670
      %s672 = smul.u32 8, %s25
      %p673 = scmp.lt.s32.totalorder %s24, 1
      %s674 = scalar_select %p673, %s24, 1
      %p675 = scmp.lt.s32.totalorder %s25, 0
      %s676 = scalar_select %p675, %s25, 0
      %s677 = sadd.s32 %s676, %s674
      %s678 = smul.addr %s677, 2
      %s679 = scalar_lea.vmem %s8, %s678
      %v681 = vld [vmem:[%s567] sm:$0xf]
      %v682 = vld [vmem:[%s567 + $0x4] sm:$0x1]
      %v683 = vld [vmem:[%s567 + $0x8] sm:$0xf]
      %v684 = vld [vmem:[%s567 + $0xc] sm:$0x1]
      %v685 = vld [vmem:[%s567 + $0x10] sm:$0xf]
      %v686 = vld [vmem:[%s567 + $0x14] sm:$0x1]
      %v687 = vld [vmem:[%s567 + $0x18] sm:$0xf]
      %v688 = vld [vmem:[%s567 + $0x1c] sm:$0x1]
      %v689 = vld [vmem:[%s567 + $0x20] sm:$0xf]
      %v690 = vld [vmem:[%s567 + $0x24] sm:$0x1]
      %v691 = vld [vmem:[%s567 + $0x28] sm:$0xf]
      %v692 = vld [vmem:[%s567 + $0x2c] sm:$0x1]
      %v693 = vld [vmem:[%s567 + $0x30] sm:$0xf]
      %v694 = vld [vmem:[%s567 + $0x34] sm:$0x1]
      %v695 = vld [vmem:[%s567 + $0x38] sm:$0xf]
      %v696 = vld [vmem:[%s567 + $0x3c] sm:$0x1]
      %v697 = vld [vmem:[%s584] sm:$0xf]
      %v698 = vld [vmem:[%s584 + $0x4] sm:$0x1]
      %v699 = vld [vmem:[%s601] sm:$0xf]
      %v700 = vld [vmem:[%s601 + $0x8] sm:$0xf]
      %v701 = vld [vmem:[%s601 + $0x10] sm:$0xf]
      %v702 = vld [vmem:[%s601 + $0x18] sm:$0xf]
      %v703 = vld [vmem:[%s601 + $0x20] sm:$0xf]
      %v704 = vld [vmem:[%s601 + $0x28] sm:$0xf]
      %v705 = vld [vmem:[%s601 + $0x30] sm:$0xf]
      %v706 = vld [vmem:[%s601 + $0x38] sm:$0xf]
      %v707 = vld [vmem:[%s618] sm:$0xf]
      %v708 = vld [vmem:[%s635] sm:$0xf]
      %v709 = vld [vmem:[%s635 + $0x4] sm:$0x1]
      %v710 = vld [vmem:[%s635 + $0x8] sm:$0xf]
      %v711 = vld [vmem:[%s635 + $0xc] sm:$0x1]
      %v712 = vld [vmem:[%s635 + $0x10] sm:$0xf]
      %v713 = vld [vmem:[%s635 + $0x14] sm:$0x1]
      %v714 = vld [vmem:[%s635 + $0x18] sm:$0xf]
      %v715 = vld [vmem:[%s635 + $0x1c] sm:$0x1]
      %v716 = vld [vmem:[%s635 + $0x20] sm:$0xf]
      %v717 = vld [vmem:[%s635 + $0x24] sm:$0x1]
      %v718 = vld [vmem:[%s635 + $0x28] sm:$0xf]
      %v719 = vld [vmem:[%s635 + $0x2c] sm:$0x1]
      %v720 = vld [vmem:[%s635 + $0x30] sm:$0xf]
      %v721 = vld [vmem:[%s635 + $0x34] sm:$0x1]
      %v722 = vld [vmem:[%s635 + $0x38] sm:$0xf]
      %v723 = vld [vmem:[%s635 + $0x3c] sm:$0x1]
      %v724 = vld [vmem:[%s656] sm:$0xf]
      %v725 = vld [vmem:[%s656 + $0x8] sm:$0xf]
      %v726 = vld [vmem:[%s656 + $0x10] sm:$0xf]
      %v727 = vld [vmem:[%s656 + $0x18] sm:$0xf]
      %v728 = vld [vmem:[%s656 + $0x20] sm:$0xf]
      %v729 = vld [vmem:[%s656 + $0x28] sm:$0xf]
      %v730 = vld [vmem:[%s656 + $0x30] sm:$0xf]
      %v731 = vld [vmem:[%s656 + $0x38] sm:$0xf]
      %v732 = vld [vmem:[%s6] sm:$0x3]
      %s733 = scalar_lea.vmem %s6, 2
      %v734 = vld [vmem:[%s733] sm:$0x3]
      %v743 = vunpack.c.l.b16 %v699
      %v744 = vunpack.c.l.b16 %v700
      %v745 = vunpack.c.l.b16 %v701
      %v746 = vunpack.c.l.b16 %v702
      %v747 = vunpack.c.l.b16 %v703
      %v748 = vunpack.c.l.b16 %v704
      %v749 = vunpack.c.l.b16 %v705
      %v750 = vunpack.c.l.b16 %v706
      %v751 = vpack.c.b16 %v744, %v743
      %v752 = vpack.c.b16 %v746, %v745
      %v753 = vpack.c.b16 %v748, %v747
      %v754 = vpack.c.b16 %v750, %v749
      %vm755 = vcmask 31744
      %v757 = vsel %vm755, %v751, 0
      %v760 = vsel %vm755, %v752, 0
      %v763 = vsel %vm755, %v753, 0
      %v766 = vsel %vm755, %v754, 0
      %vm768 = vcmask 1041408
      %v770 = vsel %vm768, %v734, 0
      %772 = vmatpush.bf16.msra.mxu0 0
      %773 = vmatpush.bf16.msra.mxu0 0
      %774 = vmatpush.bf16.msra.mxu0 0
      %775 = vmatpush.bf16.msra.mxu0 0
      %776 = vmatpush.bf16.msra.mxu0 0
      %777 = vmatpush.bf16.msra.mxu0 0
      %778 = vmatpush.bf16.msra.mxu0 0
      %779 = vmatpush.bf16.msra.mxu0 %v770
      %780 = vmatmul.bf16.gmra.mxu0 %v757
      %v781 = vpop.f32.mrf.mxu0
      %v782 = vadd.f32 0.0, %v781
      %v783 = vpop.f32.mrf.mxu0
      %v784 = vadd.f32 0.0, %v783
      %785 = vmatmul.bf16.gmra.mxu0 %v760
      %v786 = vpop.f32.mrf.mxu0
      %v787 = vadd.f32 0.0, %v786
      %v788 = vpop.f32.mrf.mxu0
      %v789 = vadd.f32 0.0, %v788
      %790 = vmatmul.bf16.gmra.mxu0 %v763
      %v791 = vpop.f32.mrf.mxu0
      %v792 = vadd.f32 0.0, %v791
      %v793 = vpop.f32.mrf.mxu0
      %v794 = vadd.f32 0.0, %v793
      %795 = vmatmul.bf16.gmra.mxu0 %v766
      %v796 = vpop.f32.mrf.mxu0
      %v797 = vadd.f32 0.0, %v796
      %v798 = vpop.f32.mrf.mxu0
      %v799 = vadd.f32 0.0, %v798
      %800 = vdwg.mxu0
      %v809 = vunpack.c.l.b16 %v681
      %v810 = vunpack.c.l.b16 %v683
      %v811 = vunpack.c.l.b16 %v685
      %v812 = vunpack.c.l.b16 %v687
      %v813 = vunpack.c.l.b16 %v689
      %v814 = vunpack.c.l.b16 %v691
      %v815 = vunpack.c.l.b16 %v693
      %v816 = vunpack.c.l.b16 %v695
      %v817 = vpack.c.b16 %v810, %v809
      %v818 = vpack.c.b16 %v812, %v811
      %v819 = vpack.c.b16 %v814, %v813
      %v820 = vpack.c.b16 %v816, %v815
      %v822 = vsel %vm755, %v817, 0
      %v825 = vsel %vm755, %v818, 0
      %v828 = vsel %vm755, %v819, 0
      %v831 = vsel %vm755, %v820, 0
      %v834 = vsel %vm768, %v732, 0
      %836 = vmatpush.bf16.msra.mxu0 0
      %837 = vmatpush.bf16.msra.mxu0 0
      %838 = vmatpush.bf16.msra.mxu0 0
      %839 = vmatpush.bf16.msra.mxu0 0
      %840 = vmatpush.bf16.msra.mxu0 0
      %841 = vmatpush.bf16.msra.mxu0 0
      %842 = vmatpush.bf16.msra.mxu0 0
      %843 = vmatpush.bf16.msra.mxu0 %v834
      %844 = vmatmul.bf16.gmra.mxu0 %v822
      %v845 = vpop.f32.mrf.mxu0
      %v846 = vadd.f32 %v782, %v845
      %v847 = vpop.f32.mrf.mxu0
      %v848 = vadd.f32 %v784, %v847
      %849 = vmatmul.bf16.gmra.mxu0 %v825
      %v850 = vpop.f32.mrf.mxu0
      %v851 = vadd.f32 %v787, %v850
      %v852 = vpop.f32.mrf.mxu0
      %v853 = vadd.f32 %v789, %v852
      %854 = vmatmul.bf16.gmra.mxu0 %v828
      %v855 = vpop.f32.mrf.mxu0
      %v856 = vadd.f32 %v792, %v855
      %v857 = vpop.f32.mrf.mxu0
      %v858 = vadd.f32 %v794, %v857
      %859 = vmatmul.bf16.gmra.mxu0 %v831
      %v860 = vpop.f32.mrf.mxu0
      %v861 = vadd.f32 %v797, %v860
      %v862 = vpop.f32.mrf.mxu0
      %v863 = vadd.f32 %v799, %v862
      %864 = vdwg.mxu0
      %vm865 = vsmask.f32 3328
      %vm866 = vsmask.f32 7440
      %vm867 = vmor %vm865, %vm866
      %v869 = vshrl.u32 %v681, 16
      %v871 = vrot.slane %v869, 4
      %v872 = vshll.u32 %v681, 16
      %v874 = vrot.slane %v872, 5
      %v875 = vor.u32 %v871, %v874
      %v876 = vrot.slane %v875, 4
      %v878 = vshll.u32 %v682, 16
      %v880 = vrot.slane %v878, 5
      %v881 = vsel %vm867, %v876, %v880
      %v883 = vshrl.u32 %v683, 16
      %v885 = vrot.slane %v883, 4
      %v886 = vshll.u32 %v683, 16
      %v888 = vrot.slane %v886, 5
      %v889 = vor.u32 %v885, %v888
      %v890 = vrot.slane %v889, 4
      %v892 = vshll.u32 %v684, 16
      %v894 = vrot.slane %v892, 5
      %v895 = vsel %vm867, %v890, %v894
      %v897 = vshrl.u32 %v685, 16
      %v899 = vrot.slane %v897, 4
      %v900 = vshll.u32 %v685, 16
      %v902 = vrot.slane %v900, 5
      %v903 = vor.u32 %v899, %v902
      %v904 = vrot.slane %v903, 4
      %v906 = vshll.u32 %v686, 16
      %v908 = vrot.slane %v906, 5
      %v909 = vsel %vm867, %v904, %v908
      %v911 = vshrl.u32 %v687, 16
      %v913 = vrot.slane %v911, 4
      %v914 = vshll.u32 %v687, 16
      %v916 = vrot.slane %v914, 5
      %v917 = vor.u32 %v913, %v916
      %v918 = vrot.slane %v917, 4
      %v920 = vshll.u32 %v688, 16
      %v922 = vrot.slane %v920, 5
      %v923 = vsel %vm867, %v918, %v922
      %v925 = vshrl.u32 %v689, 16
      %v927 = vrot.slane %v925, 4
      %v928 = vshll.u32 %v689, 16
      %v930 = vrot.slane %v928, 5
      %v931 = vor.u32 %v927, %v930
      %v932 = vrot.slane %v931, 4
      %v934 = vshll.u32 %v690, 16
      %v936 = vrot.slane %v934, 5
      %v937 = vsel %vm867, %v932, %v936
      %v939 = vshrl.u32 %v691, 16
      %v941 = vrot.slane %v939, 4
      %v942 = vshll.u32 %v691, 16
      %v944 = vrot.slane %v942, 5
      %v945 = vor.u32 %v941, %v944
      %v946 = vrot.slane %v945, 4
      %v948 = vshll.u32 %v692, 16
      %v950 = vrot.slane %v948, 5
      %v951 = vsel %vm867, %v946, %v950
      %v953 = vshrl.u32 %v693, 16
      %v955 = vrot.slane %v953, 4
      %v956 = vshll.u32 %v693, 16
      %v958 = vrot.slane %v956, 5
      %v959 = vor.u32 %v955, %v958
      %v960 = vrot.slane %v959, 4
      %v962 = vshll.u32 %v694, 16
      %v964 = vrot.slane %v962, 5
      %v965 = vsel %vm867, %v960, %v964
      %v967 = vshrl.u32 %v695, 16
      %v969 = vrot.slane %v967, 4
      %v970 = vshll.u32 %v695, 16
      %v972 = vrot.slane %v970, 5
      %v973 = vor.u32 %v969, %v972
      %v974 = vrot.slane %v973, 4
      %v976 = vshll.u32 %v696, 16
      %v978 = vrot.slane %v976, 5
      %v979 = vsel %vm867, %v974, %v978
      %s980 = scalar_lea.vmem %s6, 4
      %v981 = vld [vmem:[%s980] sm:$0x3]
      %v982 = vunpack.c.l.b16 %v881
      %v983 = vunpack.c.l.b16 %v895
      %v984 = vunpack.c.l.b16 %v909
      %v985 = vunpack.c.l.b16 %v923
      %v986 = vunpack.c.l.b16 %v937
      %v987 = vunpack.c.l.b16 %v951
      %v988 = vunpack.c.l.b16 %v965
      %v989 = vunpack.c.l.b16 %v979
      %v990 = vpack.c.b16 %v983, %v982
      %v991 = vpack.c.b16 %v985, %v984
      %v992 = vpack.c.b16 %v987, %v986
      %v993 = vpack.c.b16 %v989, %v988
      %v995 = vsel %vm755, %v990, 0
      %v998 = vsel %vm755, %v991, 0
      %v1001 = vsel %vm755, %v992, 0
      %v1004 = vsel %vm755, %v993, 0
      %v1007 = vsel %vm768, %v981, 0
      %1009 = vmatpush.bf16.msra.mxu0 0
      %1010 = vmatpush.bf16.msra.mxu0 0
      %1011 = vmatpush.bf16.msra.mxu0 0
      %1012 = vmatpush.bf16.msra.mxu0 0
      %1013 = vmatpush.bf16.msra.mxu0 0
      %1014 = vmatpush.bf16.msra.mxu0 0
      %1015 = vmatpush.bf16.msra.mxu0 0
      %1016 = vmatpush.bf16.msra.mxu0 %v1007
      %1017 = vmatmul.bf16.gmra.mxu0 %v995
      %v1018 = vpop.f32.mrf.mxu0
      %v1019 = vadd.f32 0.0, %v1018
      %v1020 = vpop.f32.mrf.mxu0
      %v1021 = vadd.f32 0.0, %v1020
      %1022 = vmatmul.bf16.gmra.mxu0 %v998
      %v1023 = vpop.f32.mrf.mxu0
      %v1024 = vadd.f32 0.0, %v1023
      %v1025 = vpop.f32.mrf.mxu0
      %v1026 = vadd.f32 0.0, %v1025
      %1027 = vmatmul.bf16.gmra.mxu0 %v1001
      %v1028 = vpop.f32.mrf.mxu0
      %v1029 = vadd.f32 0.0, %v1028
      %v1030 = vpop.f32.mrf.mxu0
      %v1031 = vadd.f32 0.0, %v1030
      %1032 = vmatmul.bf16.gmra.mxu0 %v1004
      %v1033 = vpop.f32.mrf.mxu0
      %v1034 = vadd.f32 0.0, %v1033
      %v1035 = vpop.f32.mrf.mxu0
      %v1036 = vadd.f32 0.0, %v1035
      %1037 = vdwg.mxu0
      %v1038 = vadd.f32 %v846, %v1019
      %v1039 = vadd.f32 %v848, %v1021
      %v1040 = vadd.f32 %v851, %v1024
      %v1041 = vadd.f32 %v853, %v1026
      %v1042 = vadd.f32 %v856, %v1029
      %v1043 = vadd.f32 %v858, %v1031
      %v1044 = vadd.f32 %v861, %v1034
      %v1045 = vadd.f32 %v863, %v1036
      %s1046 = scalar_lea.vmem %s6, 6
      %v1047 = vld [vmem:[%s1046] sm:$0x3]
      %v1056 = vunpack.c.l.b16 %v708
      %v1057 = vunpack.c.l.b16 %v710
      %v1058 = vunpack.c.l.b16 %v712
      %v1059 = vunpack.c.l.b16 %v714
      %v1060 = vunpack.c.l.b16 %v716
      %v1061 = vunpack.c.l.b16 %v718
      %v1062 = vunpack.c.l.b16 %v720
      %v1063 = vunpack.c.l.b16 %v722
      %v1064 = vpack.c.b16 %v1057, %v1056
      %v1065 = vpack.c.b16 %v1059, %v1058
      %v1066 = vpack.c.b16 %v1061, %v1060
      %v1067 = vpack.c.b16 %v1063, %v1062
      %v1069 = vsel %vm755, %v1064, 0
      %v1072 = vsel %vm755, %v1065, 0
      %v1075 = vsel %vm755, %v1066, 0
      %v1078 = vsel %vm755, %v1067, 0
      %v1081 = vsel %vm768, %v1047, 0
      %1083 = vmatpush.bf16.msra.mxu0 0
      %1084 = vmatpush.bf16.msra.mxu0 0
      %1085 = vmatpush.bf16.msra.mxu0 0
      %1086 = vmatpush.bf16.msra.mxu0 0
      %1087 = vmatpush.bf16.msra.mxu0 0
      %1088 = vmatpush.bf16.msra.mxu0 0
      %1089 = vmatpush.bf16.msra.mxu0 0
      %1090 = vmatpush.bf16.msra.mxu0 %v1081
      %1091 = vmatmul.bf16.gmra.mxu0 %v1069
      %v1092 = vpop.f32.mrf.mxu0
      %v1093 = vadd.f32 0.0, %v1092
      %v1094 = vpop.f32.mrf.mxu0
      %v1095 = vadd.f32 0.0, %v1094
      %1096 = vmatmul.bf16.gmra.mxu0 %v1072
      %v1097 = vpop.f32.mrf.mxu0
      %v1098 = vadd.f32 0.0, %v1097
      %v1099 = vpop.f32.mrf.mxu0
      %v1100 = vadd.f32 0.0, %v1099
      %1101 = vmatmul.bf16.gmra.mxu0 %v1075
      %v1102 = vpop.f32.mrf.mxu0
      %v1103 = vadd.f32 0.0, %v1102
      %v1104 = vpop.f32.mrf.mxu0
      %v1105 = vadd.f32 0.0, %v1104
      %1106 = vmatmul.bf16.gmra.mxu0 %v1078
      %v1107 = vpop.f32.mrf.mxu0
      %v1108 = vadd.f32 0.0, %v1107
      %v1109 = vpop.f32.mrf.mxu0
      %v1110 = vadd.f32 0.0, %v1109
      %1111 = vdwg.mxu0
      %v1112 = vadd.f32 %v1038, %v1093
      %v1113 = vadd.f32 %v1039, %v1095
      %v1114 = vadd.f32 %v1040, %v1098
      %v1115 = vadd.f32 %v1041, %v1100
      %v1116 = vadd.f32 %v1042, %v1103
      %v1117 = vadd.f32 %v1043, %v1105
      %v1118 = vadd.f32 %v1044, %v1108
      %v1119 = vadd.f32 %v1045, %v1110
      %s1120 = scalar_lea.vmem %s6, 8
      %v1121 = vld [vmem:[%s1120] sm:$0x3]
      %v1130 = vunpack.c.l.b16 %v724
      %v1131 = vunpack.c.l.b16 %v725
      %v1132 = vunpack.c.l.b16 %v726
      %v1133 = vunpack.c.l.b16 %v727
      %v1134 = vunpack.c.l.b16 %v728
      %v1135 = vunpack.c.l.b16 %v729
      %v1136 = vunpack.c.l.b16 %v730
      %v1137 = vunpack.c.l.b16 %v731
      %v1138 = vpack.c.b16 %v1131, %v1130
      %v1139 = vpack.c.b16 %v1133, %v1132
      %v1140 = vpack.c.b16 %v1135, %v1134
      %v1141 = vpack.c.b16 %v1137, %v1136
      %v1143 = vsel %vm755, %v1138, 0
      %v1146 = vsel %vm755, %v1139, 0
      %v1149 = vsel %vm755, %v1140, 0
      %v1152 = vsel %vm755, %v1141, 0
      %v1155 = vsel %vm768, %v1121, 0
      %1157 = vmatpush.bf16.msra.mxu0 0
      %1158 = vmatpush.bf16.msra.mxu0 0
      %1159 = vmatpush.bf16.msra.mxu0 0
      %1160 = vmatpush.bf16.msra.mxu0 0
      %1161 = vmatpush.bf16.msra.mxu0 0
      %1162 = vmatpush.bf16.msra.mxu0 0
      %1163 = vmatpush.bf16.msra.mxu0 0
      %1164 = vmatpush.bf16.msra.mxu0 %v1155
      %1165 = vmatmul.bf16.gmra.mxu0 %v1143
      %v1166 = vpop.f32.mrf.mxu0
      %v1167 = vadd.f32 0.0, %v1166
      %v1168 = vpop.f32.mrf.mxu0
      %v1169 = vadd.f32 0.0, %v1168
      %1170 = vmatmul.bf16.gmra.mxu0 %v1146
      %v1171 = vpop.f32.mrf.mxu0
      %v1172 = vadd.f32 0.0, %v1171
      %v1173 = vpop.f32.mrf.mxu0
      %v1174 = vadd.f32 0.0, %v1173
      %1175 = vmatmul.bf16.gmra.mxu0 %v1149
      %v1176 = vpop.f32.mrf.mxu0
      %v1177 = vadd.f32 0.0, %v1176
      %v1178 = vpop.f32.mrf.mxu0
      %v1179 = vadd.f32 0.0, %v1178
      %1180 = vmatmul.bf16.gmra.mxu0 %v1152
      %v1181 = vpop.f32.mrf.mxu0
      %v1182 = vadd.f32 0.0, %v1181
      %v1183 = vpop.f32.mrf.mxu0
      %v1184 = vadd.f32 0.0, %v1183
      %1185 = vdwg.mxu0
      %v1186 = vadd.f32 %v1112, %v1167
      %v1187 = vadd.f32 %v1113, %v1169
      %v1188 = vadd.f32 %v1114, %v1172
      %v1189 = vadd.f32 %v1115, %v1174
      %v1190 = vadd.f32 %v1116, %v1177
      %v1191 = vadd.f32 %v1117, %v1179
      %v1192 = vadd.f32 %v1118, %v1182
      %v1193 = vadd.f32 %v1119, %v1184
      %v1195 = vshrl.u32 %v708, 16
      %v1197 = vrot.slane %v1195, 4
      %v1198 = vshll.u32 %v708, 16
      %v1200 = vrot.slane %v1198, 5
      %v1201 = vor.u32 %v1197, %v1200
      %v1202 = vrot.slane %v1201, 4
      %v1204 = vshll.u32 %v709, 16
      %v1206 = vrot.slane %v1204, 5
      %v1207 = vsel %vm867, %v1202, %v1206
      %v1209 = vshrl.u32 %v710, 16
      %v1211 = vrot.slane %v1209, 4
      %v1212 = vshll.u32 %v710, 16
      %v1214 = vrot.slane %v1212, 5
      %v1215 = vor.u32 %v1211, %v1214
      %v1216 = vrot.slane %v1215, 4
      %v1218 = vshll.u32 %v711, 16
      %v1220 = vrot.slane %v1218, 5
      %v1221 = vsel %vm867, %v1216, %v1220
      %v1223 = vshrl.u32 %v712, 16
      %v1225 = vrot.slane %v1223, 4
      %v1226 = vshll.u32 %v712, 16
      %v1228 = vrot.slane %v1226, 5
      %v1229 = vor.u32 %v1225, %v1228
      %v1230 = vrot.slane %v1229, 4
      %v1232 = vshll.u32 %v713, 16
      %v1234 = vrot.slane %v1232, 5
      %v1235 = vsel %vm867, %v1230, %v1234
      %v1237 = vshrl.u32 %v714, 16
      %v1239 = vrot.slane %v1237, 4
      %v1240 = vshll.u32 %v714, 16
      %v1242 = vrot.slane %v1240, 5
      %v1243 = vor.u32 %v1239, %v1242
      %v1244 = vrot.slane %v1243, 4
      %v1246 = vshll.u32 %v715, 16
      %v1248 = vrot.slane %v1246, 5
      %v1249 = vsel %vm867, %v1244, %v1248
      %v1251 = vshrl.u32 %v716, 16
      %v1253 = vrot.slane %v1251, 4
      %v1254 = vshll.u32 %v716, 16
      %v1256 = vrot.slane %v1254, 5
      %v1257 = vor.u32 %v1253, %v1256
      %v1258 = vrot.slane %v1257, 4
      %v1260 = vshll.u32 %v717, 16
      %v1262 = vrot.slane %v1260, 5
      %v1263 = vsel %vm867, %v1258, %v1262
      %v1265 = vshrl.u32 %v718, 16
      %v1267 = vrot.slane %v1265, 4
      %v1268 = vshll.u32 %v718, 16
      %v1270 = vrot.slane %v1268, 5
      %v1271 = vor.u32 %v1267, %v1270
      %v1272 = vrot.slane %v1271, 4
      %v1274 = vshll.u32 %v719, 16
      %v1276 = vrot.slane %v1274, 5
      %v1277 = vsel %vm867, %v1272, %v1276
      %v1279 = vshrl.u32 %v720, 16
      %v1281 = vrot.slane %v1279, 4
      %v1282 = vshll.u32 %v720, 16
      %v1284 = vrot.slane %v1282, 5
      %v1285 = vor.u32 %v1281, %v1284
      %v1286 = vrot.slane %v1285, 4
      %v1288 = vshll.u32 %v721, 16
      %v1290 = vrot.slane %v1288, 5
      %v1291 = vsel %vm867, %v1286, %v1290
      %v1293 = vshrl.u32 %v722, 16
      %v1295 = vrot.slane %v1293, 4
      %v1296 = vshll.u32 %v722, 16
      %v1298 = vrot.slane %v1296, 5
      %v1299 = vor.u32 %v1295, %v1298
      %v1300 = vrot.slane %v1299, 4
      %v1302 = vshll.u32 %v723, 16
      %v1304 = vrot.slane %v1302, 5
      %v1305 = vsel %vm867, %v1300, %v1304
      %s1306 = scalar_lea.vmem %s6, 10
      %v1307 = vld [vmem:[%s1306] sm:$0x3]
      %v1308 = vunpack.c.l.b16 %v1207
      %v1309 = vunpack.c.l.b16 %v1221
      %v1310 = vunpack.c.l.b16 %v1235
      %v1311 = vunpack.c.l.b16 %v1249
      %v1312 = vunpack.c.l.b16 %v1263
      %v1313 = vunpack.c.l.b16 %v1277
      %v1314 = vunpack.c.l.b16 %v1291
      %v1315 = vunpack.c.l.b16 %v1305
      %v1316 = vpack.c.b16 %v1309, %v1308
      %v1317 = vpack.c.b16 %v1311, %v1310
      %v1318 = vpack.c.b16 %v1313, %v1312
      %v1319 = vpack.c.b16 %v1315, %v1314
      %v1321 = vsel %vm755, %v1316, 0
      %v1324 = vsel %vm755, %v1317, 0
      %v1327 = vsel %vm755, %v1318, 0
      %v1330 = vsel %vm755, %v1319, 0
      %v1333 = vsel %vm768, %v1307, 0
      %1335 = vmatpush.bf16.msra.mxu0 0
      %1336 = vmatpush.bf16.msra.mxu0 0
      %1337 = vmatpush.bf16.msra.mxu0 0
      %1338 = vmatpush.bf16.msra.mxu0 0
      %1339 = vmatpush.bf16.msra.mxu0 0
      %1340 = vmatpush.bf16.msra.mxu0 0
      %1341 = vmatpush.bf16.msra.mxu0 0
      %1342 = vmatpush.bf16.msra.mxu0 %v1333
      %1343 = vmatmul.bf16.gmra.mxu0 %v1321
      %v1344 = vpop.f32.mrf.mxu0
      %v1345 = vadd.f32 0.0, %v1344
      %v1346 = vpop.f32.mrf.mxu0
      %v1347 = vadd.f32 0.0, %v1346
      %1348 = vmatmul.bf16.gmra.mxu0 %v1324
      %v1349 = vpop.f32.mrf.mxu0
      %v1350 = vadd.f32 0.0, %v1349
      %v1351 = vpop.f32.mrf.mxu0
      %v1352 = vadd.f32 0.0, %v1351
      %1353 = vmatmul.bf16.gmra.mxu0 %v1327
      %v1354 = vpop.f32.mrf.mxu0
      %v1355 = vadd.f32 0.0, %v1354
      %v1356 = vpop.f32.mrf.mxu0
      %v1357 = vadd.f32 0.0, %v1356
      %1358 = vmatmul.bf16.gmra.mxu0 %v1330
      %v1359 = vpop.f32.mrf.mxu0
      %v1360 = vadd.f32 0.0, %v1359
      %v1361 = vpop.f32.mrf.mxu0
      %v1362 = vadd.f32 0.0, %v1361
      %1363 = vdwg.mxu0
      %v1364 = vadd.f32 %v1186, %v1345
      %v1365 = vadd.f32 %v1187, %v1347
      %v1366 = vadd.f32 %v1188, %v1350
      %v1367 = vadd.f32 %v1189, %v1352
      %v1368 = vadd.f32 %v1190, %v1355
      %v1369 = vadd.f32 %v1191, %v1357
      %v1370 = vadd.f32 %v1192, %v1360
      %v1371 = vadd.f32 %v1193, %v1362
      %s1372 = scalar_lea.vmem %s6, 12
      %v1373 = vld [vmem:[%s1372] sm:$0x3]
      %v1375 = vunpack.c.l.b16 %v697
      %v1376 = vpack.c.b16 %v811, %v810
      %v1377 = vpack.c.b16 %v813, %v812
      %v1378 = vpack.c.b16 %v815, %v814
      %v1379 = vpack.c.b16 %v1375, %v816
      %v1381 = vsel %vm755, %v1376, 0
      %v1384 = vsel %vm755, %v1377, 0
      %v1387 = vsel %vm755, %v1378, 0
      %v1390 = vsel %vm755, %v1379, 0
      %v1393 = vsel %vm768, %v1373, 0
      %1395 = vmatpush.bf16.msra.mxu0 0
      %1396 = vmatpush.bf16.msra.mxu0 0
      %1397 = vmatpush.bf16.msra.mxu0 0
      %1398 = vmatpush.bf16.msra.mxu0 0
      %1399 = vmatpush.bf16.msra.mxu0 0
      %1400 = vmatpush.bf16.msra.mxu0 0
      %1401 = vmatpush.bf16.msra.mxu0 0
      %1402 = vmatpush.bf16.msra.mxu0 %v1393
      %1403 = vmatmul.bf16.gmra.mxu0 %v1381
      %v1404 = vpop.f32.mrf.mxu0
      %v1405 = vadd.f32 0.0, %v1404
      %v1406 = vpop.f32.mrf.mxu0
      %v1407 = vadd.f32 0.0, %v1406
      %1408 = vmatmul.bf16.gmra.mxu0 %v1384
      %v1409 = vpop.f32.mrf.mxu0
      %v1410 = vadd.f32 0.0, %v1409
      %v1411 = vpop.f32.mrf.mxu0
      %v1412 = vadd.f32 0.0, %v1411
      %1413 = vmatmul.bf16.gmra.mxu0 %v1387
      %v1414 = vpop.f32.mrf.mxu0
      %v1415 = vadd.f32 0.0, %v1414
      %v1416 = vpop.f32.mrf.mxu0
      %v1417 = vadd.f32 0.0, %v1416
      %1418 = vmatmul.bf16.gmra.mxu0 %v1390
      %v1419 = vpop.f32.mrf.mxu0
      %v1420 = vadd.f32 0.0, %v1419
      %v1421 = vpop.f32.mrf.mxu0
      %v1422 = vadd.f32 0.0, %v1421
      %1423 = vdwg.mxu0
      %v1424 = vadd.f32 %v1364, %v1405
      %v1425 = vadd.f32 %v1365, %v1407
      %v1426 = vadd.f32 %v1366, %v1410
      %v1427 = vadd.f32 %v1367, %v1412
      %v1428 = vadd.f32 %v1368, %v1415
      %v1429 = vadd.f32 %v1369, %v1417
      %v1430 = vadd.f32 %v1370, %v1420
      %v1431 = vadd.f32 %v1371, %v1422
      %s1432 = scalar_lea.vmem %s6, 14
      %v1433 = vld [vmem:[%s1432] sm:$0x3]
      %v1435 = vunpack.c.l.b16 %v707
      %v1436 = vpack.c.b16 %v745, %v744
      %v1437 = vpack.c.b16 %v747, %v746
      %v1438 = vpack.c.b16 %v749, %v748
      %v1439 = vpack.c.b16 %v1435, %v750
      %v1441 = vsel %vm755, %v1436, 0
      %v1444 = vsel %vm755, %v1437, 0
      %v1447 = vsel %vm755, %v1438, 0
      %v1450 = vsel %vm755, %v1439, 0
      %v1453 = vsel %vm768, %v1433, 0
      %1455 = vmatpush.bf16.msra.mxu0 0
      %1456 = vmatpush.bf16.msra.mxu0 0
      %1457 = vmatpush.bf16.msra.mxu0 0
      %1458 = vmatpush.bf16.msra.mxu0 0
      %1459 = vmatpush.bf16.msra.mxu0 0
      %1460 = vmatpush.bf16.msra.mxu0 0
      %1461 = vmatpush.bf16.msra.mxu0 0
      %1462 = vmatpush.bf16.msra.mxu0 %v1453
      %1463 = vmatmul.bf16.gmra.mxu0 %v1441
      %v1464 = vpop.f32.mrf.mxu0
      %v1465 = vadd.f32 0.0, %v1464
      %v1466 = vpop.f32.mrf.mxu0
      %v1467 = vadd.f32 0.0, %v1466
      %1468 = vmatmul.bf16.gmra.mxu0 %v1444
      %v1469 = vpop.f32.mrf.mxu0
      %v1470 = vadd.f32 0.0, %v1469
      %v1471 = vpop.f32.mrf.mxu0
      %v1472 = vadd.f32 0.0, %v1471
      %1473 = vmatmul.bf16.gmra.mxu0 %v1447
      %v1474 = vpop.f32.mrf.mxu0
      %v1475 = vadd.f32 0.0, %v1474
      %v1476 = vpop.f32.mrf.mxu0
      %v1477 = vadd.f32 0.0, %v1476
      %1478 = vmatmul.bf16.gmra.mxu0 %v1450
      %v1479 = vpop.f32.mrf.mxu0
      %v1480 = vadd.f32 0.0, %v1479
      %v1481 = vpop.f32.mrf.mxu0
      %v1482 = vadd.f32 0.0, %v1481
      %1483 = vdwg.mxu0
      %v1484 = vadd.f32 %v1424, %v1465
      %v1485 = vadd.f32 %v1425, %v1467
      %v1486 = vadd.f32 %v1426, %v1470
      %v1487 = vadd.f32 %v1427, %v1472
      %v1488 = vadd.f32 %v1428, %v1475
      %v1489 = vadd.f32 %v1429, %v1477
      %v1490 = vadd.f32 %v1430, %v1480
      %v1491 = vadd.f32 %v1431, %v1482
      %v1493 = vshrl.u32 %v697, 16
      %v1495 = vrot.slane %v1493, 4
      %v1496 = vshll.u32 %v697, 16
      %v1498 = vrot.slane %v1496, 5
      %v1499 = vor.u32 %v1495, %v1498
      %v1500 = vrot.slane %v1499, 4
      %v1502 = vshll.u32 %v698, 16
      %v1504 = vrot.slane %v1502, 5
      %v1505 = vsel %vm867, %v1500, %v1504
      %s1506 = scalar_lea.vmem %s6, 16
      %v1507 = vld [vmem:[%s1506] sm:$0x3]
      %v1508 = vunpack.c.l.b16 %v1505
      %v1509 = vpack.c.b16 %v984, %v983
      %v1510 = vpack.c.b16 %v986, %v985
      %v1511 = vpack.c.b16 %v988, %v987
      %v1512 = vpack.c.b16 %v1508, %v989
      %v1514 = vsel %vm755, %v1509, 0
      %v1517 = vsel %vm755, %v1510, 0
      %v1520 = vsel %vm755, %v1511, 0
      %v1523 = vsel %vm755, %v1512, 0
      %v1526 = vsel %vm768, %v1507, 0
      %1528 = vmatpush.bf16.msra.mxu0 0
      %1529 = vmatpush.bf16.msra.mxu0 0
      %1530 = vmatpush.bf16.msra.mxu0 0
      %1531 = vmatpush.bf16.msra.mxu0 0
      %1532 = vmatpush.bf16.msra.mxu0 0
      %1533 = vmatpush.bf16.msra.mxu0 0
      %1534 = vmatpush.bf16.msra.mxu0 0
      %1535 = vmatpush.bf16.msra.mxu0 %v1526
      %1536 = vmatmul.bf16.gmra.mxu0 %v1514
      %v1537 = vpop.f32.mrf.mxu0
      %v1538 = vadd.f32 0.0, %v1537
      %v1539 = vpop.f32.mrf.mxu0
      %v1540 = vadd.f32 0.0, %v1539
      %1541 = vmatmul.bf16.gmra.mxu0 %v1517
      %v1542 = vpop.f32.mrf.mxu0
      %v1543 = vadd.f32 0.0, %v1542
      %v1544 = vpop.f32.mrf.mxu0
      %v1545 = vadd.f32 0.0, %v1544
      %1546 = vmatmul.bf16.gmra.mxu0 %v1520
      %v1547 = vpop.f32.mrf.mxu0
      %v1548 = vadd.f32 0.0, %v1547
      %v1549 = vpop.f32.mrf.mxu0
      %v1550 = vadd.f32 0.0, %v1549
      %1551 = vmatmul.bf16.gmra.mxu0 %v1523
      %v1552 = vpop.f32.mrf.mxu0
      %v1553 = vadd.f32 0.0, %v1552
      %v1554 = vpop.f32.mrf.mxu0
      %v1555 = vadd.f32 0.0, %v1554
      %1556 = vdwg.mxu0
      %v1557 = vadd.f32 %v1484, %v1538
      %v1558 = vadd.f32 %v1485, %v1540
      %v1559 = vadd.f32 %v1486, %v1543
      %v1560 = vadd.f32 %v1487, %v1545
      %v1561 = vadd.f32 %v1488, %v1548
      %v1562 = vadd.f32 %v1489, %v1550
      %v1563 = vadd.f32 %v1490, %v1553
      %v1564 = vadd.f32 %v1491, %v1555
      %v1565 = vsel %vm755, %v1557, 0.0
      %v1566 = vsel %vm755, %v1558, 0.0
      %v1567 = vadd.f32 %v1565, %v1566
      %v1568 = vsel %vm755, %v1559, 0.0
      %v1569 = vadd.f32 %v1567, %v1568
      %v1570 = vsel %vm755, %v1560, 0.0
      %v1571 = vadd.f32 %v1569, %v1570
      %v1572 = vsel %vm755, %v1561, 0.0
      %v1573 = vadd.f32 %v1571, %v1572
      %v1574 = vsel %vm755, %v1562, 0.0
      %v1575 = vadd.f32 %v1573, %v1574
      %v1576 = vsel %vm755, %v1563, 0.0
      %v1577 = vadd.f32 %v1575, %v1576
      %v1578 = vsel %vm755, %v1564, 0.0
      %v1579 = vadd.f32 %v1577, %v1578
      %v1580 = vrot.slane %v1579, 4
      %v1581 = vadd.f32 %v1579, %v1580
      %v1582 = vrot.slane %v1581, 2
      %v1583 = vadd.f32 %v1581, %v1582
      %v1584 = vrot.slane %v1583, 1
      %v1585 = vadd.f32 %v1583, %v1584
      %v1586 = vmul.f32 %v1557, %v1557
      %v1587 = vmul.f32 %v1558, %v1558
      %v1588 = vmul.f32 %v1559, %v1559
      %v1589 = vmul.f32 %v1560, %v1560
      %v1590 = vmul.f32 %v1561, %v1561
      %v1591 = vmul.f32 %v1562, %v1562
      %v1592 = vmul.f32 %v1563, %v1563
      %v1593 = vmul.f32 %v1564, %v1564
      %v1594 = vsel %vm755, %v1586, 0.0
      %v1595 = vsel %vm755, %v1587, 0.0
      %v1596 = vadd.f32 %v1594, %v1595
      %v1597 = vsel %vm755, %v1588, 0.0
      %v1598 = vadd.f32 %v1596, %v1597
      %v1599 = vsel %vm755, %v1589, 0.0
      %v1600 = vadd.f32 %v1598, %v1599
      %v1601 = vsel %vm755, %v1590, 0.0
      %v1602 = vadd.f32 %v1600, %v1601
      %v1603 = vsel %vm755, %v1591, 0.0
      %v1604 = vadd.f32 %v1602, %v1603
      %v1605 = vsel %vm755, %v1592, 0.0
      %v1606 = vadd.f32 %v1604, %v1605
      %v1607 = vsel %vm755, %v1593, 0.0
      %v1608 = vadd.f32 %v1606, %v1607
      %v1609 = vrot.slane %v1608, 4
      %v1610 = vadd.f32 %v1608, %v1609
      %v1611 = vrot.slane %v1610, 2
      %v1612 = vadd.f32 %v1610, %v1611
      %v1613 = vrot.slane %v1612, 1
      %v1614 = vadd.f32 %v1612, %v1613
      %vm1615 = vcmask 1040384
      %v1616 = vsel %vm1615, %v1585, %v1614
      %vm1617 = vcmask 25600
      %1618 = vst.msk [vmem:[%s679] sm:$0x3] %vm1617, %v1616
      %1619 = vst.msk [vmem:[%s671] sm:$0xff] %vm755, %v1557
      %1620 = vst.msk [vmem:[%s671 + $0x8] sm:$0xff] %vm755, %v1558
      %1621 = vst.msk [vmem:[%s671 + $0x10] sm:$0xff] %vm755, %v1559
      %1622 = vst.msk [vmem:[%s671 + $0x18] sm:$0xff] %vm755, %v1560
      %1623 = vst.msk [vmem:[%s671 + $0x20] sm:$0xff] %vm755, %v1561
      %1624 = vst.msk [vmem:[%s671 + $0x28] sm:$0xff] %vm755, %v1562
      %1625 = vst.msk [vmem:[%s671 + $0x30] sm:$0xff] %vm755, %v1563
      %1626 = vst.msk [vmem:[%s671 + $0x38] sm:$0xff] %vm755, %v1564
      %s1627 = smul.u32 8, %s25
      %p1628 = scmp.lt.s32.totalorder %s24, 1
      %s1629 = scalar_select %p1628, %s24, 1
      %p1630 = scmp.lt.s32.totalorder %s1627, 7
      %s1631 = scalar_select %p1630, %s1627, 7
      %s1632 = smul.addr %s1629, 8
      %s1633 = sadd.s32 %s1631, %s1632
      %s1634 = smul.addr %s1633, 8
      %s1635 = scalar_lea.vmem %s7, %s1634
      %p1636 = scmp.lt.s32.totalorder %s24, 1
      %s1637 = scalar_select %p1636, %s24, 1
      %p1638 = scmp.lt.s32.totalorder %s25, 0
      %s1639 = scalar_select %p1638, %s25, 0
      %s1640 = sadd.s32 %s1639, %s1637
      %s1641 = smul.addr %s1640, 2
      %s1642 = scalar_lea.vmem %s8, %s1641
      // Predicated region
      $region49: #{downsampling_forward.2} parent=47 // pred_check
        %p1643 = pneg %p249
      $region50: #{downsampling_forward.2} parent=47 // pred_check_branch
        %1645 = sbr.rel (%p1643) target = $region52
      $region51: #{downsampling_forward.2} parent=47 // pred_region
        %s1646 = smul.u32 8, %s25
      $region52: #{downsampling_forward.2} parent=47 // pred_fallthru
        _
      // Predicated region
      $region53: #{downsampling_forward.2} parent=47 // pred_check
        %p1647 = pneg %p277
      $region54: #{downsampling_forward.2} parent=47 // pred_check_branch
        %1649 = sbr.rel (%p1647) target = $region56
      $region55: #{downsampling_forward.2} parent=47 // pred_region
        _
      $region56: #{downsampling_forward.2} parent=47 // pred_fallthru
        _
    $region48: #{downsampling_forward.2} parent=5 // pred_fallthru
      _
    %p1650 = scmp.le.s32.totalorder 2, %s15
    // Predicated region
    $region57: #{downsampling_forward.2} parent=5 // pred_check
      %p1651 = pneg %p1650
    $region58: #{downsampling_forward.2} parent=5 // pred_check_branch
      %1653 = sbr.rel (%p1651) target = $region60
    $region59: #{downsampling_forward.2} parent=5 // pred_region
      %s1654 = ssub.s32 %s15, 2
      // Predicated region
      $region61: #{downsampling_forward.2} parent=59 // pred_check
        %p1655 = pneg %p255
      $region62: #{downsampling_forward.2} parent=59 // pred_check_branch
        %1657 = sbr.rel (%p1655) target = $region64
      $region63: #{downsampling_forward.2} parent=59 // pred_region
        %s1658 = smul.u32 8, %s27
        %p1659 = scmp.lt.s32.totalorder %s26, 1
        %s1660 = scalar_select %p1659, %s26, 1
        %p1661 = scmp.lt.s32.totalorder %s1658, 7
        %s1662 = scalar_select %p1661, %s1658, 7
        %s1663 = smul.addr %s1660, 8
        %s1664 = sadd.s32 %s1662, %s1663
        %s1665 = smul.addr %s1664, 8
        %s1666 = scalar_lea.vmem %s7, %s1665
      $region64: #{downsampling_forward.2} parent=59 // pred_fallthru
        _
      // Predicated region
      $region65: #{downsampling_forward.2} parent=59 // pred_check
        %p1667 = pneg %p283
      $region66: #{downsampling_forward.2} parent=59 // pred_check_branch
        %1669 = sbr.rel (%p1667) target = $region68
      $region67: #{downsampling_forward.2} parent=59 // pred_region
        %p1670 = scmp.lt.s32.totalorder %s26, 1
        %s1671 = scalar_select %p1670, %s26, 1
        %p1672 = scmp.lt.s32.totalorder %s27, 0
        %s1673 = scalar_select %p1672, %s27, 0
        %s1674 = sadd.s32 %s1673, %s1671
        %s1675 = smul.addr %s1674, 2
        %s1676 = scalar_lea.vmem %s8, %s1675
      $region68: #{downsampling_forward.2} parent=59 // pred_fallthru
        _
    $region60: #{downsampling_forward.2} parent=5 // pred_fallthru
      _
  $region6: #{downsampling_forward.2} parent=0 // loop_footer
    %s19 = sadd.s32 1, %s15
  $region7: #{downsampling_forward.2} parent=0 // loop_footer_branch
    %14 = sbr.rel target = $region3
  $region8: #{downsampling_forward.2} parent=0 // loop_exit
    _

</llo_original>
